<compile_context>
chip_gen: v7x
topology: tpu7x:2x2x1
jax: 0.10.0
libtpu: 0.0.40
codegen_flags: <defaults>
</compile_context>

<pallas_src>
import numpy as np
import jax
import jax.numpy as jnp
from jax.experimental import pallas as pl
from jax.experimental.pallas import tpu as pltpu

LANE = 128
TILE_M_TARGET = 8192          # lane-dense points per grid step (VMEM-safe with
                              # the in-kernel (kp, tile) temporaries + buffers)


def _round_up(x, m):
    return (x + m - 1) // m * m


def _vmem_capacity_bytes():
    # v5e/v6e: 128 MiB per TensorCore, v7x: 64 MiB -- query when possible.
    try:
        info = pltpu.get_tpu_info()
        cap = int(getattr(info, "vmem_capacity_bytes", 0))
        if cap > 0:
            return cap
    except Exception:
        pass
    return 64 * 1024 * 1024   # conservative (v7x-sized) fallback


def _choose_tile(M, target=TILE_M_TARGET):
    """Largest lane-dense tile <= target that divides round_up(M,128) exactly
    (so Mp == round_up(M,128) and the last tile is not padding); prefer an even
    tile count so v7x's two TensorCores split the parallel axis evenly."""
    Mp128 = _round_up(M, LANE)
    cap = max(LANE, min(_round_up(target, LANE), Mp128))
    largest = None
    largest_even = None
    t = cap
    while t >= LANE:
        if Mp128 % t == 0:
            if largest is None:
                largest = t
            if (Mp128 // t) % 2 == 0 and largest_even is None:
                largest_even = t
            if largest is not None and largest_even is not None:
                break
        t -= LANE
    if largest is None or largest < cap // 2:
        # Awkward M with no good divisor: pad up to a multiple of the target
        # tile instead (padded tail columns are sliced off after the call).
        return cap, _round_up(M, cap)
    tile = largest
    if largest_even is not None and 2 * largest_even >= largest:
        tile = largest_even
    return tile, Mp128


def _tps_kernel(cw_ref, ca_ref, cpts_ref, coords_ref, o_ref):
    # coords_ref: (8, T)   rows [1, x, y, z, 0, 0, 0, 0] of the sampling grid tile
    # cpts_ref:   (KP, 128) cols 0..2 = control-point x/y/z, rows >= N are zero
    # cw_ref:     (R, KP)  TPS weights W per output row (row = b*3 + c), cols >= N zero
    # ca_ref:     (R, 8)   affine coeffs [A0, A1, A2, A3, 0, 0, 0, 0]
    ge = coords_ref[...]                       # (8, T)
    gx = ge[1:2, :]
    gy = ge[2:3, :]
    gz = ge[3:4, :]
    cp = cpts_ref[...]                         # (KP, 128)
    px = cp[:, 0:1]                            # (KP, 1)
    py = cp[:, 1:2]
    pz = cp[:, 2:3]
    # Radial basis recomputed on VPU/EUP (exact f32); lane/sublane broadcasts.
    dx = gx - px                               # (KP, T)
    dy = gy - py
    dz = gz - pz
    d2 = dx * dx + dy * dy + dz * dz
    d2 = jnp.where(d2 == 0.0, 1.0, d2)         # dist_squared[dist==0] = 1
    u = d2 * jnp.log(d2)                       # rows >= N are garbage but hit zero W cols
    # All MACs on the MXU: W-part + affine part, one lane-dense f32 store.
    o_ref[...] = (jnp.dot(cw_ref[...], u, preferred_element_type=jnp.float32)
                  + jnp.dot(ca_ref[...], ge, preferred_element_type=jnp.float32))


class TpsGridGenPallas:
    def __init__(self, out_h=16, out_w=16, out_d=16, grid_size=3,
                 tile_m_target=TILE_M_TARGET):
        self.out_h, self.out_w, self.out_d = out_h, out_w, out_d
        self.N = N = grid_size ** 3

        # ---- control points (same np.meshgrid ordering as the torch module) ----
        ax = np.linspace(-1.0, 1.0, grid_size)
        P_Y, P_X, P_Z = np.meshgrid(ax, ax, ax)          # default 'xy' indexing
        px = P_X.reshape(-1)
        py = P_Y.reshape(-1)
        pz = P_Z.reshape(-1)
        self.px = px.astype(np.float32)
        self.py = py.astype(np.float32)
        self.pz = pz.astype(np.float32)

        # ---- compute_L_inverse: tiny (N+4)^2 inverse (setup glue) ----
        # TODO(synk): matrix inverse has no Pallas primitive; host-side numpy,
        # exactly like the torch module's __init__ (not per-call work).
        pd2 = ((px[:, None] - px[None, :]) ** 2
               + (py[:, None] - py[None, :]) ** 2
               + (pz[:, None] - pz[None, :]) ** 2)
        pd2[pd2 == 0] = 1.0
        K = pd2 * np.log(pd2)
        P = np.concatenate([np.ones((N, 1)), px[:, None], py[:, None], pz[:, None]], 1)
        L = np.block([[K, P], [P.T, np.zeros((4, 4))]])
        Li = np.linalg.inv(L).astype(np.float32)         # (N+4, N+4)
        # Only Li[:, :N] is ever used per call (folding it further is N/A once
        # U is recomputed in-kernel; the per-call einsum is tiny and jit-fused).
        self.LiN = jnp.asarray(Li[:, :N])                # (N+4, N)

        # ---- dense sampling grid: meshgrid(linspace(w), linspace(h), linspace(d)) ----
        xs = np.linspace(-1.0, 1.0, out_w)
        ys = np.linspace(-1.0, 1.0, out_h)
        zs = np.linspace(-1.0, 1.0, out_d)
        GX = np.broadcast_to(xs[None, :, None], (out_h, out_w, out_d))
        GY = np.broadcast_to(ys[:, None, None], (out_h, out_w, out_d))
        GZ = np.broadcast_to(zs[None, None, :], (out_h, out_w, out_d))
        gx = GX.reshape(-1).astype(np.float32)
        gy = GY.reshape(-1).astype(np.float32)
        gz = GZ.reshape(-1).astype(np.float32)

        self.M = M = out_h * out_w * out_d
        self.kp = _round_up(N + 4, 8)                    # padded contraction dim
        self.tile_m, self.Mp = _choose_tile(M, tile_m_target)
        self.n_tiles = self.Mp // self.tile_m

        # Streamed coordinate slab, rows [1, x, y, z] (32 B/point instead of the
        # 128 B/point f32 design matrix of v1); padded columns are zeros.
        coords = np.zeros((8, self.Mp), np.float32)
        coords[0, :M] = 1.0
        coords[1, :M] = gx
        coords[2, :M] = gy
        coords[3, :M] = gz
        self.coords = jnp.asarray(coords)

        # Control points, VMEM-resident constant for the kernel (16 KiB).
        cpts = np.zeros((self.kp, 128), np.float32)
        cpts[:N, 0] = self.px
        cpts[:N, 1] = self.py
        cpts[:N, 2] = self.pz
        self.cpts = jnp.asarray(cpts)

        # flat grid kept for the pure-JAX reference
        self._gx = jnp.asarray(gx)
        self._gy = jnp.asarray(gy)
        self._gz = jnp.asarray(gz)

        # Generation-aware scoped-VMEM limit (96 MiB on v5e/v6e, 48 MiB on v7x).
        self.vmem_limit = int(min(96 * 2 ** 20, (3 * _vmem_capacity_bytes()) // 4))

        self._forward = jax.jit(self._forward_impl, static_argnames=("channel_first",))

    # -- per-call glue: [W | A] = Li[:, :N] @ Q  (tiny matmul, jit-fused) --
    def _coeffs(self, theta):
        B = theta.shape[0]
        Q = theta.reshape(B, 3, self.N).astype(jnp.float32)
        return jnp.einsum("ij,bcj->bci", self.LiN, Q)     # (B, 3, N+4)

    def _forward_impl(self, theta, channel_first=False):
        B = theta.shape[0]
        C = self._coeffs(theta).reshape(B * 3, self.N + 4)   # row = b*3 + c
        rpad = _round_up(B * 3, 8)
        W = C[:, : self.N]                                   # (B*3, N)
        A = C[:, self.N:]                                    # (B*3, 4) = [A0,A1,A2,A3]
        Cw = jnp.pad(W, ((0, rpad - B * 3), (0, self.kp - self.N)))   # (rpad, kp)
        Ca = jnp.pad(A, ((0, rpad - B * 3), (0, 4)))                  # (rpad, 8)

        tile_m, kp = self.tile_m, self.kp
        out = pl.pallas_call(
            _tps_kernel,
            out_shape=jax.ShapeDtypeStruct((rpad, self.Mp), jnp.float32),
            grid=(self.n_tiles,),
            in_specs=[
                pl.BlockSpec((rpad, kp), lambda m: (0, 0)),      # W coeffs (tiny, resident)
                pl.BlockSpec((rpad, 8), lambda m: (0, 0)),       # affine coeffs
                pl.BlockSpec((kp, 128), lambda m: (0, 0)),       # control points
                pl.BlockSpec((8, tile_m), lambda m: (0, m)),     # grid-coord tile (streamed)
            ],
            out_specs=pl.BlockSpec((rpad, tile_m), lambda m: (0, m)),
            compiler_params=pltpu.CompilerParams(
                dimension_semantics=("parallel",),               # tiles split across TCs
                vmem_limit_bytes=self.vmem_limit),
        )(Cw, Ca, self.cpts, self.coords)

        out = out[: B * 3]
        if self.Mp != self.M:
            out = out[:, : self.M]
        res = out.reshape(B, 3, self.out_h, self.out_w, self.out_d)
        if channel_first:
            return res                                            # (B, 3, H, W, D)
        # (B, H, W, D, 3): the module's contract.
        # TODO(synk): for very large grids fold this permute into the consumer
        # (grid_sample); it is a separate XLA pass over the whole output.
        return jnp.transpose(res, (0, 2, 3, 4, 1))

    def __call__(self, theta):
        return self._forward(theta, channel_first=False)

    def forward_channel_first(self, theta):
        return self._forward(theta, channel_first=True)

    # -- pure-JAX reference of apply_transformation, for verification --
    def reference(self, theta):
        B = theta.shape[0]
        Cfull = self._coeffs(theta)
        W = Cfull[:, :, : self.N]
        A = Cfull[:, :, self.N:]
        gx, gy, gz = self._gx, self._gy, self._gz
        px = jnp.asarray(self.px)
        py = jnp.asarray(self.py)
        pz = jnp.asarray(self.pz)
        d2 = ((gx[:, None] - px[None, :]) ** 2
              + (gy[:, None] - py[None, :]) ** 2
              + (gz[:, None] - pz[None, :]) ** 2)
        d2 = jnp.where(d2 == 0.0, 1.0, d2)
        U = d2 * jnp.log(d2)                              # (M, N)
        outs = []
        for c in range(3):
            val = (A[:, c, 0][:, None]
                   + A[:, c, 1][:, None] * gx[None, :]
                   + A[:, c, 2][:, None] * gy[None, :]
                   + A[:, c, 3][:, None] * gz[None, :]
                   + jnp.einsum("mn,bn->bm", U, W[:, c, :],
                                precision=jax.lax.Precision.HIGHEST))
            outs.append(val)
        res = jnp.stack(outs, axis=-1)                    # (B, M, 3)
        return res.reshape(B, self.out_h, self.out_w, self.out_d, 3)


if __name__ == "__main__":
    B = 2
    H = Wd = D = 16
    grid_size = 3
    N = grid_size ** 3

    tps = TpsGridGenPallas(out_h=H, out_w=Wd, out_d=D, grid_size=grid_size)

    # theta = target control-point coords = regular grid + small perturbation
    key = jax.random.PRNGKey(0)
    base = jnp.concatenate(
        [jnp.asarray(tps.px), jnp.asarray(tps.py), jnp.asarray(tps.pz)])
    theta = base[None, :] + 0.1 * jax.random.normal(key, (B, 3 * N), dtype=jnp.float32)

    out = jax.block_until_ready(tps(theta))
    assert out.shape == (B, H, Wd, D, 3), out.shape

    ref = jax.block_until_ready(tps.reference(theta))
    np.testing.assert_allclose(np.asarray(out), np.asarray(ref), rtol=1e-3, atol=1e-3)

    out_cf = jax.block_until_ready(tps.forward_channel_first(theta))
    assert out_cf.shape == (B, 3, H, Wd, D), out_cf.shape
    np.testing.assert_allclose(
        np.transpose(np.asarray(out_cf), (0, 2, 3, 4, 1)), np.asarray(out),
        rtol=1e-6, atol=1e-6)

    print("KERNEL_OK")
</pallas_src>

<mosaic_0001>
module attributes {stable_mosaic.version = 11 : i64} {
  func.func @_tps_kernel(%arg0: i32, %arg1: memref<8x32xf32, #tpu.memory_space<vmem>>, %arg2: memref<8x8xf32, #tpu.memory_space<vmem>>, %arg3: memref<32x128xf32, #tpu.memory_space<vmem>>, %arg4: memref<8x2048xf32, #tpu.memory_space<vmem>>, %arg5: memref<8x2048xf32, #tpu.memory_space<vmem>>) attributes {dimension_semantics = [#tpu.dimension_semantics<parallel>], iteration_bounds = array<i64: 2>, scalar_prefetch = 0 : i64, scratch_operands = 0 : i64, tpu.core_type = #tpu.core_type<tc>, window_params = [{pipeline_mode = #tpu.pipeline_mode<synchronous>, transform_indices = @transform_0, window_bounds = array<i64: 8, 32>}, {pipeline_mode = #tpu.pipeline_mode<synchronous>, transform_indices = @transform_1, window_bounds = array<i64: 8, 8>}, {pipeline_mode = #tpu.pipeline_mode<synchronous>, transform_indices = @transform_2, window_bounds = array<i64: 32, 128>}, {transform_indices = @transform_3, window_bounds = array<i64: 8, 2048>}, {transform_indices = @transform_4, window_bounds = array<i64: 8, 2048>}]} {
    %c0 = arith.constant 0 : index
    %c0_0 = arith.constant 0 : index
    %0 = vector.load %arg4[%c0, %c0_0] : memref<8x2048xf32, #tpu.memory_space<vmem>>, vector<8x2048xf32>
    %1 = vector.extract_strided_slice %0 {offsets = [1, 0], sizes = [1, 2048], strides = [1, 1]} : vector<8x2048xf32> to vector<1x2048xf32>
    %2 = vector.extract_strided_slice %0 {offsets = [2, 0], sizes = [1, 2048], strides = [1, 1]} : vector<8x2048xf32> to vector<1x2048xf32>
    %3 = vector.extract_strided_slice %0 {offsets = [3, 0], sizes = [1, 2048], strides = [1, 1]} : vector<8x2048xf32> to vector<1x2048xf32>
    %c0_1 = arith.constant 0 : index
    %c0_2 = arith.constant 0 : index
    %4 = vector.load %arg3[%c0_1, %c0_2] : memref<32x128xf32, #tpu.memory_space<vmem>>, vector<32x128xf32>
    %5 = vector.extract_strided_slice %4 {offsets = [0, 0], sizes = [32, 1], strides = [1, 1]} : vector<32x128xf32> to vector<32x1xf32>
    %6 = vector.extract_strided_slice %4 {offsets = [0, 1], sizes = [32, 1], strides = [1, 1]} : vector<32x128xf32> to vector<32x1xf32>
    %7 = vector.extract_strided_slice %4 {offsets = [0, 2], sizes = [32, 1], strides = [1, 1]} : vector<32x128xf32> to vector<32x1xf32>
    %8 = vector.broadcast %1 : vector<1x2048xf32> to vector<32x2048xf32>
    %9 = vector.broadcast %5 : vector<32x1xf32> to vector<32x2048xf32>
    %10 = arith.subf %8, %9 : vector<32x2048xf32>
    %11 = vector.broadcast %2 : vector<1x2048xf32> to vector<32x2048xf32>
    %12 = vector.broadcast %6 : vector<32x1xf32> to vector<32x2048xf32>
    %13 = arith.subf %11, %12 : vector<32x2048xf32>
    %14 = vector.broadcast %3 : vector<1x2048xf32> to vector<32x2048xf32>
    %15 = vector.broadcast %7 : vector<32x1xf32> to vector<32x2048xf32>
    %16 = arith.subf %14, %15 : vector<32x2048xf32>
    %17 = arith.mulf %10, %10 : vector<32x2048xf32>
    %18 = arith.mulf %13, %13 : vector<32x2048xf32>
    %19 = arith.addf %17, %18 : vector<32x2048xf32>
    %20 = arith.mulf %16, %16 : vector<32x2048xf32>
    %21 = arith.addf %19, %20 : vector<32x2048xf32>
    %cst = arith.constant 0.000000e+00 : f32
    %22 = vector.broadcast %cst : f32 to vector<32x2048xf32>
    %23 = arith.cmpf oeq, %21, %22 : vector<32x2048xf32>
    %cst_3 = arith.constant 1.000000e+00 : f32
    %24 = vector.broadcast %cst_3 : f32 to vector<32x2048xf32>
    %25 = arith.select %23, %24, %21 : vector<32x2048xi1>, vector<32x2048xf32>
    %26 = math.log %25 : vector<32x2048xf32>
    %27 = arith.mulf %25, %26 : vector<32x2048xf32>
    %c0_4 = arith.constant 0 : index
    %c0_5 = arith.constant 0 : index
    %28 = vector.load %arg1[%c0_4, %c0_5] : memref<8x32xf32, #tpu.memory_space<vmem>>, vector<8x32xf32>
    %cst_6 = arith.constant dense<0.000000e+00> : vector<8x2048xf32>
    %29 = tpu.matmul %28, %27, %cst_6 {dimension_numbers = #tpu.dot_dimension_numbers<[1], [0], [0], [1], [0, 0, 1, 1], [], []>} : vector<8x32xf32>, vector<32x2048xf32>, vector<8x2048xf32> -> vector<8x2048xf32>
    %c0_7 = arith.constant 0 : index
    %c0_8 = arith.constant 0 : index
    %30 = vector.load %arg2[%c0_7, %c0_8] : memref<8x8xf32, #tpu.memory_space<vmem>>, vector<8x8xf32>
    %cst_9 = arith.constant dense<0.000000e+00> : vector<8x2048xf32>
    %31 = tpu.matmul %30, %0, %cst_9 {dimension_numbers = #tpu.dot_dimension_numbers<[1], [0], [0], [1], [0, 0, 1, 1], [], []>} : vector<8x8xf32>, vector<8x2048xf32>, vector<8x2048xf32> -> vector<8x2048xf32>
    %32 = arith.addf %29, %31 : vector<8x2048xf32>
    %c0_10 = arith.constant 0 : index
    %c0_11 = arith.constant 0 : index
    %33 = vector.load %arg5[%c0_10, %c0_11] : memref<8x2048xf32, #tpu.memory_space<vmem>>, vector<8x2048xf32>
    tpu.vector_store %arg5[%c0_10, %c0_11], %32 {strides = array<i32>} : memref<8x2048xf32, #tpu.memory_space<vmem>>, vector<8x2048xf32>,
    return
  }
  func.func @transform_0(%arg0: i32) -> (i32, i32) {
    %c0_i32 = arith.constant 0 : i32
    %c0_i32_0 = arith.constant 0 : i32
    %c0_i32_1 = arith.constant 0 : i32
    return %c0_i32, %c0_i32_0 : i32, i32
  }
  func.func @transform_1(%arg0: i32) -> (i32, i32) {
    %c0_i32 = arith.constant 0 : i32
    %c0_i32_0 = arith.constant 0 : i32
    %c0_i32_1 = arith.constant 0 : i32
    return %c0_i32, %c0_i32_0 : i32, i32
  }
  func.func @transform_2(%arg0: i32) -> (i32, i32) {
    %c0_i32 = arith.constant 0 : i32
    %c0_i32_0 = arith.constant 0 : i32
    %c0_i32_1 = arith.constant 0 : i32
    return %c0_i32, %c0_i32_0 : i32, i32
  }
  func.func @transform_3(%arg0: i32) -> (i32, i32) {
    %c0_i32 = arith.constant 0 : i32
    %c0_i32_0 = arith.constant 0 : i32
    return %c0_i32, %arg0 : i32, i32
  }
  func.func @transform_4(%arg0: i32) -> (i32, i32) {
    %c0_i32 = arith.constant 0 : i32
    %c0_i32_0 = arith.constant 0 : i32
    return %c0_i32, %arg0 : i32, i32
  }
}

</mosaic_0001>

<llo_original>
// kernel: _forward_impl.1
$region0: #{_forward_impl.1}
  #allocation0 [shape = 'u32[]', space=smem, size = 0x4, offset = 0x4, fixed_abs, tag = 'smem constant byte address 0x4 - core index']
  #allocation1 [shape = 'u32[144,128]{1,0:T(1,128)}', space=vmem, size = 0x12000, scoped, tag = 'internal scratch']
  %s0 = inlined_call_operand.vmem [shape: f32[8,32], index: 0, kind: input, shape index: {}]
  %s1 = inlined_call_operand.vmem [shape: f32[8,8], index: 1, kind: input, shape index: {}]
  %s2 = inlined_call_operand.vmem [shape: f32[32,128], index: 2, kind: input, shape index: {}]
  %s3 = inlined_call_operand.hbm [shape: f32[8,4096], index: 3, kind: input, shape index: {}]
  %s4 = inlined_call_operand.vmem [shape: f32[8,4096], index: 4, kind: output, shape index: {}]
  %s5 = sld [smem:[#allocation0]]
  $region53: #{_forward_impl.1} parent=0
    _
  %s7 = ssub.s32 1, %s5
  %s8 = scalar_select 0, %s7, %s5
  $region1: #{_forward_impl.1} parent=0
    #allocation2 [shape = 'u8[131072]{0}', space=vmem, size = 0x20000, scoped, tag = 'input window, operand 3']
    #allocation3 [shape = 's32[2]{0}', space=sflag, size = 0x8, scoped, tag = 'scoped memory for _forward_impl.1']
    %9 = vsyncpa [#allocation3], 0
    %s10 = scalar_lea.sflag [#allocation3], 1
    %11 = vsyncpa %s10, 0
    loop: start=0, step=1, limit=4
    $region2: #{_forward_impl.1} parent=1 // loop_pre_header
      _
    $region3: #{_forward_impl.1} parent=1 // loop_header
      %s13 = sphi 0, %s17
      %p14 = scmp.ge.s32.totalorder %s13, 4
      %s21 = sphi 0, %s21
      %s23 = sphi 0, %s21
      %s24 = sphi 0, %s23
      %s38 = sphi 0, %s24
      %s42 = sphi 0, %s42
      %s44 = sphi 0, %s42
      %s45 = sphi 0, %s44
      %s59 = sphi 0, %s45
      %s63 = sphi 0, %s63
      %s65 = sphi 0, %s63
      %s66 = sphi 0, %s65
      %s80 = sphi 0, %s66
      %s86 = sphi 0, %s88
      %s89 = sphi 0, %s86
      %s90 = sphi 0, %s89
      %s106 = sphi 0, %s90
      %s112 = sphi 0, %s114
      %s115 = sphi 0, %s112
      %s116 = sphi 0, %s115
      %s132 = sphi 0, %s116
    $region4: #{_forward_impl.1} parent=1 // loop_header_branch
      %16 = sbr.rel (%p14) target = $region8
    $region5: #{_forward_impl.1} parent=1 // loop_body
      %s18 = ssub.s32 %s13, 1
      %s19 = ssub.s32 %s13, 2
      %s20 = sadd.s32 %s13, 1
      %s22 = sadd.s32 %s21, 1
      %p25 = scmp.eq.s32.totalorder %s13, 1
      %p26 = scmp.ne.s32.totalorder %s21, %s23
      %p27 = scmp.eq.s32.totalorder %s13, 0
      %p28 = por %p26, %p27
      %p29 = scmp.ne.s32.totalorder %s21, %s23
      %p30 = scmp.eq.s32.totalorder %s18, 1
      %p31 = por %p29, %p30
      %p32 = scmp.ne.s32.totalorder %s23, %s24
      %p33 = scmp.eq.s32.totalorder %s18, 0
      %p34 = por %p32, %p33
      %p35 = scmp.ne.s32.totalorder %s23, %s24
      %p36 = scmp.eq.s32.totalorder %s19, 1
      %p37 = por %p35, %p36
      %p39 = scmp.ne.s32.totalorder %s24, %s38
      %p40 = scmp.eq.s32.totalorder %s19, 0
      %p41 = por %p39, %p40
      %s43 = sadd.s32 %s42, 1
      %p46 = scmp.eq.s32.totalorder %s13, 1
      %p47 = scmp.ne.s32.totalorder %s42, %s44
      %p48 = scmp.eq.s32.totalorder %s13, 0
      %p49 = por %p47, %p48
      %p50 = scmp.ne.s32.totalorder %s42, %s44
      %p51 = scmp.eq.s32.totalorder %s18, 1
      %p52 = por %p50, %p51
      %p53 = scmp.ne.s32.totalorder %s44, %s45
      %p54 = scmp.eq.s32.totalorder %s18, 0
      %p55 = por %p53, %p54
      %p56 = scmp.ne.s32.totalorder %s44, %s45
      %p57 = scmp.eq.s32.totalorder %s19, 1
      %p58 = por %p56, %p57
      %p60 = scmp.ne.s32.totalorder %s45, %s59
      %p61 = scmp.eq.s32.totalorder %s19, 0
      %p62 = por %p60, %p61
      %s64 = sadd.s32 %s63, 1
      %p67 = scmp.eq.s32.totalorder %s13, 1
      %p68 = scmp.ne.s32.totalorder %s63, %s65
      %p69 = scmp.eq.s32.totalorder %s13, 0
      %p70 = por %p68, %p69
      %p71 = scmp.ne.s32.totalorder %s63, %s65
      %p72 = scmp.eq.s32.totalorder %s18, 1
      %p73 = por %p71, %p72
      %p74 = scmp.ne.s32.totalorder %s65, %s66
      %p75 = scmp.eq.s32.totalorder %s18, 0
      %p76 = por %p74, %p75
      %p77 = scmp.ne.s32.totalorder %s65, %s66
      %p78 = scmp.eq.s32.totalorder %s19, 1
      %p79 = por %p77, %p78
      %p81 = scmp.ne.s32.totalorder %s66, %s80
      %p82 = scmp.eq.s32.totalorder %s19, 0
      %p83 = por %p81, %p82
      %s84 = ssub.s32 %s13, %s20
      %p85 = scmp.eq.s32.totalorder %s84, 0
      %s87 = sadd.s32 %s86, 1
      %s88 = scalar_select %p85, %s86, %s87
      %p91 = pneg %p85
      %p92 = scmp.eq.s32.totalorder %s13, 1
      %p93 = por %p91, %p92
      %p94 = scmp.ne.s32.totalorder %s86, %s89
      %p95 = scmp.eq.s32.totalorder %s13, 0
      %p96 = por %p94, %p95
      %p97 = scmp.ne.s32.totalorder %s86, %s89
      %p98 = scmp.eq.s32.totalorder %s18, 1
      %p99 = por %p97, %p98
      %p100 = scmp.ne.s32.totalorder %s89, %s90
      %p101 = scmp.eq.s32.totalorder %s18, 0
      %p102 = por %p100, %p101
      %p103 = scmp.ne.s32.totalorder %s89, %s90
      %p104 = scmp.eq.s32.totalorder %s19, 1
      %p105 = por %p103, %p104
      %p107 = scmp.ne.s32.totalorder %s90, %s106
      %p108 = scmp.eq.s32.totalorder %s19, 0
      %p109 = por %p107, %p108
      %s110 = ssub.s32 %s13, %s20
      %p111 = scmp.eq.s32.totalorder %s110, 0
      %s113 = sadd.s32 %s112, 1
      %s114 = scalar_select %p111, %s112, %s113
      %p117 = pneg %p111
      %p118 = scmp.eq.s32.totalorder %s13, 1
      %p119 = por %p117, %p118
      %p120 = scmp.ne.s32.totalorder %s112, %s115
      %p121 = scmp.eq.s32.totalorder %s13, 0
      %p122 = por %p120, %p121
      %p123 = scmp.ne.s32.totalorder %s112, %s115
      %p124 = scmp.eq.s32.totalorder %s18, 1
      %p125 = por %p123, %p124
      %p126 = scmp.ne.s32.totalorder %s115, %s116
      %p127 = scmp.eq.s32.totalorder %s18, 0
      %p128 = por %p126, %p127
      %p129 = scmp.ne.s32.totalorder %s115, %s116
      %p130 = scmp.eq.s32.totalorder %s19, 1
      %p131 = por %p129, %p130
      %p133 = scmp.ne.s32.totalorder %s116, %s132
      %p134 = scmp.eq.s32.totalorder %s19, 0
      %p135 = por %p133, %p134
      %p136 = scmp.le.s32.totalorder 1, %s13
      %p137 = scmp.lt.s32.totalorder %s13, 3
      %p138 = pnand %p136, %p137
      %p139 = pneg %p138
      // Predicated region
      $region9: #{_forward_impl.1} parent=5 // pred_check
        _
      $region10: #{_forward_impl.1} parent=5 // pred_check_branch
        %141 = sbr.rel (%p138) target = $region12
      $region11: #{_forward_impl.1} parent=5 // pred_region
        %s142 = ssub.s32 %s13, 1
        // Predicated region
        $region13: #{_forward_impl.1} parent=11 // pred_check
          %p143 = pneg %p34
        $region14: #{_forward_impl.1} parent=11 // pred_check_branch
          %145 = sbr.rel (%p143) target = $region16
        $region15: #{_forward_impl.1} parent=11 // pred_region
          _
        $region16: #{_forward_impl.1} parent=11 // pred_fallthru
          _
        // Predicated region
        $region17: #{_forward_impl.1} parent=11 // pred_check
          %p146 = pneg %p55
        $region18: #{_forward_impl.1} parent=11 // pred_check_branch
          %148 = sbr.rel (%p146) target = $region20
        $region19: #{_forward_impl.1} parent=11 // pred_region
          _
        $region20: #{_forward_impl.1} parent=11 // pred_fallthru
          _
        // Predicated region
        $region21: #{_forward_impl.1} parent=11 // pred_check
          %p149 = pneg %p76
        $region22: #{_forward_impl.1} parent=11 // pred_check_branch
          %151 = sbr.rel (%p149) target = $region24
        $region23: #{_forward_impl.1} parent=11 // pred_region
          _
        $region24: #{_forward_impl.1} parent=11 // pred_fallthru
          _
      $region12: #{_forward_impl.1} parent=5 // pred_fallthru
        _
      %p152 = scmp.lt.s32.totalorder %s13, 2
      // Predicated region
      $region25: #{_forward_impl.1} parent=5 // pred_check
        %p153 = pneg %p152
      $region26: #{_forward_impl.1} parent=5 // pred_check_branch
        %155 = sbr.rel (%p153) target = $region28
      $region27: #{_forward_impl.1} parent=5 // pred_region
        // Predicated region
        $region29: #{_forward_impl.1} parent=27 // pred_check
          %p156 = pneg %p96
        $region30: #{_forward_impl.1} parent=27 // pred_check_branch
          %158 = sbr.rel (%p156) target = $region32
        $region31: #{_forward_impl.1} parent=27 // pred_region
          %s159 = sand.u32 %s86, 1
          %s160 = scalar_lea.sflag [#allocation3], %s159
          %s161 = sand.u32 %s86, 1
          %s162 = smul.addr %s161, 128
          %s163 = scalar_lea.vmem [#allocation2], %s162
          %s164 = smul.u32 16, %s13
          %s166 = ssub.s32 2048, 2048
          %167 = vsyncadd %s160, %s166
          %s168 = smul.addr %s164, 128
          %s169 = scalar_lea.hbm %s3, %s168
          %s171 = sshll.u32 %s163, 4
          %s172 = int_to_ptr.vmem [resolvable:$true] %s171
          %174 = dma.hbm_to_vmem [thread:$0]  %s169, 2048, %s172, %s160
        $region32: #{_forward_impl.1} parent=27 // pred_fallthru
          _
      $region28: #{_forward_impl.1} parent=5 // pred_fallthru
        _
      %p175 = scmp.le.s32.totalorder 1, %s13
      %p176 = scmp.lt.s32.totalorder %s13, 3
      %p177 = pnand %p175, %p176
      %p178 = pneg %p177
      // Predicated region
      $region33: #{_forward_impl.1} parent=5 // pred_check
        _
      $region34: #{_forward_impl.1} parent=5 // pred_check_branch
        %180 = sbr.rel (%p177) target = $region36
      $region35: #{_forward_impl.1} parent=5 // pred_region
        %s181 = ssub.s32 %s13, 1
        %s182 = sand.u32 %s89, 1
        %s183 = scalar_lea.sflag [#allocation3], %s182
        %s184 = sand.u32 %s89, 1
        %s185 = smul.addr %s184, 128
        %s186 = scalar_lea.vmem [#allocation2], %s185
        // Predicated region
        $region37: #{_forward_impl.1} parent=35 // pred_check
          %p187 = pneg %p102
        $region38: #{_forward_impl.1} parent=35 // pred_check_branch
          %189 = sbr.rel (%p187) target = $region40
        $region39: #{_forward_impl.1} parent=35 // pred_region
          %190 = dma.done %s183, 2048
        $region40: #{_forward_impl.1} parent=35 // pred_fallthru
          _
        %p191 = pneg %p34
        %p192 = pneg %p31
        %p193 = pneg %p55
        %p194 = pneg %p52
        %p195 = pneg %p76
        %p196 = pneg %p73
        %s197 = sand.u32 %s89, 1
        %s198 = scalar_lea.sflag [#allocation3], %s197
        %s199 = sand.u32 %s89, 1
        %s200 = smul.addr %s199, 128
        %s201 = scalar_lea.vmem [#allocation2], %s200
        %p202 = pneg %p102
        %p203 = pneg %p99
        %p204 = pneg %p128
        %p205 = pneg %p125
        %s206 = smul.u32 16, %s18
        %p207 = scmp.lt.s32.totalorder %s206, 31
        %s208 = scalar_select %p207, %s206, 31
        %s209 = smul.addr %s208, 8
        %s210 = scalar_lea.vmem %s4, %s209
        %s211 = smul.u32 16, %s18
        %s212 = smul.u32 16, %s18
        %p213 = scmp.lt.s32.totalorder %s212, 31
        %s214 = scalar_select %p213, %s212, 31
        %s215 = smul.addr %s214, 8
        %s216 = scalar_lea.vmem %s4, %s215
        %s217 = smul.u32 16, %s18
        %v218 = vld [vmem:[%s186] sm:$0xff]
        %v219 = vld [vmem:[%s186 + $0x8] sm:$0xff]
        %v220 = vld [vmem:[%s186 + $0x10] sm:$0xff]
        %v221 = vld [vmem:[%s186 + $0x18] sm:$0xff]
        %v222 = vld [vmem:[%s186 + $0x20] sm:$0xff]
        %v223 = vld [vmem:[%s186 + $0x28] sm:$0xff]
        %v224 = vld [vmem:[%s186 + $0x30] sm:$0xff]
        %v225 = vld [vmem:[%s186 + $0x38] sm:$0xff]
        %v226 = vld [vmem:[%s186 + $0x40] sm:$0xff]
        %v227 = vld [vmem:[%s186 + $0x48] sm:$0xff]
        %v228 = vld [vmem:[%s186 + $0x50] sm:$0xff]
        %v229 = vld [vmem:[%s186 + $0x58] sm:$0xff]
        %v230 = vld [vmem:[%s186 + $0x60] sm:$0xff]
        %v231 = vld [vmem:[%s186 + $0x68] sm:$0xff]
        %v232 = vld [vmem:[%s186 + $0x70] sm:$0xff]
        %v233 = vld [vmem:[%s186 + $0x78] sm:$0xff]
        %v234 = vld [vmem:[%s2] sm:$0xff]
        %v235 = vld [vmem:[%s2 + $0x8] sm:$0xff]
        %v236 = vld [vmem:[%s2 + $0x10] sm:$0xff]
        %v237 = vld [vmem:[%s2 + $0x18] sm:$0xff]
        %v238 = vlaneseq
        %v239 = vshrl.u32 %v238, 7
        %v240 = vsub.s32 1, %v239
        %v241 = vrot.slane %v218, %v240
        %v242 = vlaneseq
        %v243 = vshrl.u32 %v242, 7
        %v244 = vsub.s32 1, %v243
        %v245 = vrot.slane %v219, %v244
        %v246 = vlaneseq
        %v247 = vshrl.u32 %v246, 7
        %v248 = vsub.s32 1, %v247
        %v249 = vrot.slane %v220, %v248
        %v250 = vlaneseq
        %v251 = vshrl.u32 %v250, 7
        %v252 = vsub.s32 1, %v251
        %v253 = vrot.slane %v221, %v252
        %v254 = vlaneseq
        %v255 = vshrl.u32 %v254, 7
        %v256 = vsub.s32 1, %v255
        %v257 = vrot.slane %v222, %v256
        %v258 = vlaneseq
        %v259 = vshrl.u32 %v258, 7
        %v260 = vsub.s32 1, %v259
        %v261 = vrot.slane %v223, %v260
        %v262 = vlaneseq
        %v263 = vshrl.u32 %v262, 7
        %v264 = vsub.s32 1, %v263
        %v265 = vrot.slane %v224, %v264
        %v266 = vlaneseq
        %v267 = vshrl.u32 %v266, 7
        %v268 = vsub.s32 1, %v267
        %v269 = vrot.slane %v225, %v268
        %v270 = vlaneseq
        %v271 = vshrl.u32 %v270, 7
        %v272 = vsub.s32 1, %v271
        %v273 = vrot.slane %v226, %v272
        %v274 = vlaneseq
        %v275 = vshrl.u32 %v274, 7
        %v276 = vsub.s32 1, %v275
        %v277 = vrot.slane %v227, %v276
        %v278 = vlaneseq
        %v279 = vshrl.u32 %v278, 7
        %v280 = vsub.s32 1, %v279
        %v281 = vrot.slane %v228, %v280
        %v282 = vlaneseq
        %v283 = vshrl.u32 %v282, 7
        %v284 = vsub.s32 1, %v283
        %v285 = vrot.slane %v229, %v284
        %v286 = vlaneseq
        %v287 = vshrl.u32 %v286, 7
        %v288 = vsub.s32 1, %v287
        %v289 = vrot.slane %v230, %v288
        %v290 = vlaneseq
        %v291 = vshrl.u32 %v290, 7
        %v292 = vsub.s32 1, %v291
        %v293 = vrot.slane %v231, %v292
        %v294 = vlaneseq
        %v295 = vshrl.u32 %v294, 7
        %v296 = vsub.s32 1, %v295
        %v297 = vrot.slane %v232, %v296
        %v298 = vlaneseq
        %v299 = vshrl.u32 %v298, 7
        %v300 = vsub.s32 1, %v299
        %v301 = vrot.slane %v233, %v300
        %303 = vset.pattern.permute.xlu0 0
        %304 = vperm.xlu0 %303, %v234
        %v305 = vpop.permute.xlu0 %304
        %308 = vset.pattern.permute.xlu0 0
        %309 = vperm.xlu0 %308, %v235
        %v310 = vpop.permute.xlu0 %309
        %313 = vset.pattern.permute.xlu0 0
        %314 = vperm.xlu0 %313, %v236
        %v315 = vpop.permute.xlu0 %314
        %318 = vset.pattern.permute.xlu0 0
        %319 = vperm.xlu0 %318, %v237
        %v320 = vpop.permute.xlu0 %319
        %v322 = vsub.f32 %v241, %v305
        %v323 = vsub.f32 %v245, %v305
        %v324 = vsub.f32 %v249, %v305
        %v325 = vsub.f32 %v253, %v305
        %v326 = vsub.f32 %v257, %v305
        %v327 = vsub.f32 %v261, %v305
        %v328 = vsub.f32 %v265, %v305
        %v329 = vsub.f32 %v269, %v305
        %v330 = vsub.f32 %v273, %v305
        %v331 = vsub.f32 %v277, %v305
        %v332 = vsub.f32 %v281, %v305
        %v333 = vsub.f32 %v285, %v305
        %v334 = vsub.f32 %v289, %v305
        %v335 = vsub.f32 %v293, %v305
        %v336 = vsub.f32 %v297, %v305
        %v337 = vsub.f32 %v301, %v305
        %v338 = vsub.f32 %v241, %v310
        %v339 = vsub.f32 %v245, %v310
        %v340 = vsub.f32 %v249, %v310
        %v341 = vsub.f32 %v253, %v310
        %v342 = vsub.f32 %v257, %v310
        %v343 = vsub.f32 %v261, %v310
        %v344 = vsub.f32 %v265, %v310
        %v345 = vsub.f32 %v269, %v310
        %v346 = vsub.f32 %v273, %v310
        %v347 = vsub.f32 %v277, %v310
        %v348 = vsub.f32 %v281, %v310
        %v349 = vsub.f32 %v285, %v310
        %v350 = vsub.f32 %v289, %v310
        %v351 = vsub.f32 %v293, %v310
        %v352 = vsub.f32 %v297, %v310
        %v353 = vsub.f32 %v301, %v310
        %v354 = vsub.f32 %v241, %v315
        %v355 = vsub.f32 %v245, %v315
        %v356 = vsub.f32 %v249, %v315
        %v357 = vsub.f32 %v253, %v315
        %v358 = vsub.f32 %v257, %v315
        %v359 = vsub.f32 %v261, %v315
        %v360 = vsub.f32 %v265, %v315
        %v361 = vsub.f32 %v269, %v315
        %v362 = vsub.f32 %v273, %v315
        %v363 = vsub.f32 %v277, %v315
        %v364 = vsub.f32 %v281, %v315
        %v365 = vsub.f32 %v285, %v315
        %v366 = vsub.f32 %v289, %v315
        %v367 = vsub.f32 %v293, %v315
        %v368 = vsub.f32 %v297, %v315
        %v369 = vsub.f32 %v301, %v315
        %v370 = vsub.f32 %v241, %v320
        %v371 = vsub.f32 %v245, %v320
        %v372 = vsub.f32 %v249, %v320
        %v373 = vsub.f32 %v253, %v320
        %v374 = vsub.f32 %v257, %v320
        %v375 = vsub.f32 %v261, %v320
        %v376 = vsub.f32 %v265, %v320
        %v377 = vsub.f32 %v269, %v320
        %v378 = vsub.f32 %v273, %v320
        %v379 = vsub.f32 %v277, %v320
        %v380 = vsub.f32 %v281, %v320
        %v381 = vsub.f32 %v285, %v320
        %v382 = vsub.f32 %v289, %v320
        %v383 = vsub.f32 %v293, %v320
        %v384 = vsub.f32 %v297, %v320
        %v385 = vsub.f32 %v301, %v320
        %v386 = vlaneseq
        %v387 = vshrl.u32 %v386, 7
        %v388 = vsub.s32 2, %v387
        %v389 = vrot.slane %v218, %v388
        %v390 = vlaneseq
        %v391 = vshrl.u32 %v390, 7
        %v392 = vsub.s32 2, %v391
        %v393 = vrot.slane %v219, %v392
        %v394 = vlaneseq
        %v395 = vshrl.u32 %v394, 7
        %v396 = vsub.s32 2, %v395
        %v397 = vrot.slane %v220, %v396
        %v398 = vlaneseq
        %v399 = vshrl.u32 %v398, 7
        %v400 = vsub.s32 2, %v399
        %v401 = vrot.slane %v221, %v400
        %v402 = vlaneseq
        %v403 = vshrl.u32 %v402, 7
        %v404 = vsub.s32 2, %v403
        %v405 = vrot.slane %v222, %v404
        %v406 = vlaneseq
        %v407 = vshrl.u32 %v406, 7
        %v408 = vsub.s32 2, %v407
        %v409 = vrot.slane %v223, %v408
        %v410 = vlaneseq
        %v411 = vshrl.u32 %v410, 7
        %v412 = vsub.s32 2, %v411
        %v413 = vrot.slane %v224, %v412
        %v414 = vlaneseq
        %v415 = vshrl.u32 %v414, 7
        %v416 = vsub.s32 2, %v415
        %v417 = vrot.slane %v225, %v416
        %v418 = vlaneseq
        %v419 = vshrl.u32 %v418, 7
        %v420 = vsub.s32 2, %v419
        %v421 = vrot.slane %v226, %v420
        %v422 = vlaneseq
        %v423 = vshrl.u32 %v422, 7
        %v424 = vsub.s32 2, %v423
        %v425 = vrot.slane %v227, %v424
        %v426 = vlaneseq
        %v427 = vshrl.u32 %v426, 7
        %v428 = vsub.s32 2, %v427
        %v429 = vrot.slane %v228, %v428
        %v430 = vlaneseq
        %v431 = vshrl.u32 %v430, 7
        %v432 = vsub.s32 2, %v431
        %v433 = vrot.slane %v229, %v432
        %v434 = vlaneseq
        %v435 = vshrl.u32 %v434, 7
        %v436 = vsub.s32 2, %v435
        %v437 = vrot.slane %v230, %v436
        %v438 = vlaneseq
        %v439 = vshrl.u32 %v438, 7
        %v440 = vsub.s32 2, %v439
        %v441 = vrot.slane %v231, %v440
        %v442 = vlaneseq
        %v443 = vshrl.u32 %v442, 7
        %v444 = vsub.s32 2, %v443
        %v445 = vrot.slane %v232, %v444
        %v446 = vlaneseq
        %v447 = vshrl.u32 %v446, 7
        %v448 = vsub.s32 2, %v447
        %v449 = vrot.slane %v233, %v448
        %450 = vset.pattern.permute.xlu0 1
        %451 = vperm.xlu0 %450, %v234
        %v452 = vpop.permute.xlu0 %451
        %454 = vset.pattern.permute.xlu0 1
        %455 = vperm.xlu0 %454, %v235
        %v456 = vpop.permute.xlu0 %455
        %458 = vset.pattern.permute.xlu0 1
        %459 = vperm.xlu0 %458, %v236
        %v460 = vpop.permute.xlu0 %459
        %462 = vset.pattern.permute.xlu0 1
        %463 = vperm.xlu0 %462, %v237
        %v464 = vpop.permute.xlu0 %463
        %v466 = vsub.f32 %v389, %v452
        %v467 = vsub.f32 %v393, %v452
        %v468 = vsub.f32 %v397, %v452
        %v469 = vsub.f32 %v401, %v452
        %v470 = vsub.f32 %v405, %v452
        %v471 = vsub.f32 %v409, %v452
        %v472 = vsub.f32 %v413, %v452
        %v473 = vsub.f32 %v417, %v452
        %v474 = vsub.f32 %v421, %v452
        %v475 = vsub.f32 %v425, %v452
        %v476 = vsub.f32 %v429, %v452
        %v477 = vsub.f32 %v433, %v452
        %v478 = vsub.f32 %v437, %v452
        %v479 = vsub.f32 %v441, %v452
        %v480 = vsub.f32 %v445, %v452
        %v481 = vsub.f32 %v449, %v452
        %v482 = vsub.f32 %v389, %v456
        %v483 = vsub.f32 %v393, %v456
        %v484 = vsub.f32 %v397, %v456
        %v485 = vsub.f32 %v401, %v456
        %v486 = vsub.f32 %v405, %v456
        %v487 = vsub.f32 %v409, %v456
        %v488 = vsub.f32 %v413, %v456
        %v489 = vsub.f32 %v417, %v456
        %v490 = vsub.f32 %v421, %v456
        %v491 = vsub.f32 %v425, %v456
        %v492 = vsub.f32 %v429, %v456
        %v493 = vsub.f32 %v433, %v456
        %v494 = vsub.f32 %v437, %v456
        %v495 = vsub.f32 %v441, %v456
        %v496 = vsub.f32 %v445, %v456
        %v497 = vsub.f32 %v449, %v456
        %v498 = vsub.f32 %v389, %v460
        %v499 = vsub.f32 %v393, %v460
        %v500 = vsub.f32 %v397, %v460
        %v501 = vsub.f32 %v401, %v460
        %v502 = vsub.f32 %v405, %v460
        %v503 = vsub.f32 %v409, %v460
        %v504 = vsub.f32 %v413, %v460
        %v505 = vsub.f32 %v417, %v460
        %v506 = vsub.f32 %v421, %v460
        %v507 = vsub.f32 %v425, %v460
        %v508 = vsub.f32 %v429, %v460
        %v509 = vsub.f32 %v433, %v460
        %v510 = vsub.f32 %v437, %v460
        %v511 = vsub.f32 %v441, %v460
        %v512 = vsub.f32 %v445, %v460
        %v513 = vsub.f32 %v449, %v460
        %v514 = vsub.f32 %v389, %v464
        %v515 = vsub.f32 %v393, %v464
        %v516 = vsub.f32 %v397, %v464
        %v517 = vsub.f32 %v401, %v464
        %v518 = vsub.f32 %v405, %v464
        %v519 = vsub.f32 %v409, %v464
        %v520 = vsub.f32 %v413, %v464
        %v521 = vsub.f32 %v417, %v464
        %v522 = vsub.f32 %v421, %v464
        %v523 = vsub.f32 %v425, %v464
        %v524 = vsub.f32 %v429, %v464
        %v525 = vsub.f32 %v433, %v464
        %v526 = vsub.f32 %v437, %v464
        %v527 = vsub.f32 %v441, %v464
        %v528 = vsub.f32 %v445, %v464
        %v529 = vsub.f32 %v449, %v464
        %v530 = vlaneseq
        %v531 = vshrl.u32 %v530, 7
        %v532 = vsub.s32 3, %v531
        %v533 = vrot.slane %v218, %v532
        %v534 = vlaneseq
        %v535 = vshrl.u32 %v534, 7
        %v536 = vsub.s32 3, %v535
        %v537 = vrot.slane %v219, %v536
        %v538 = vlaneseq
        %v539 = vshrl.u32 %v538, 7
        %v540 = vsub.s32 3, %v539
        %v541 = vrot.slane %v220, %v540
        %v542 = vlaneseq
        %v543 = vshrl.u32 %v542, 7
        %v544 = vsub.s32 3, %v543
        %v545 = vrot.slane %v221, %v544
        %v546 = vlaneseq
        %v547 = vshrl.u32 %v546, 7
        %v548 = vsub.s32 3, %v547
        %v549 = vrot.slane %v222, %v548
        %v550 = vlaneseq
        %v551 = vshrl.u32 %v550, 7
        %v552 = vsub.s32 3, %v551
        %v553 = vrot.slane %v223, %v552
        %v554 = vlaneseq
        %v555 = vshrl.u32 %v554, 7
        %v556 = vsub.s32 3, %v555
        %v557 = vrot.slane %v224, %v556
        %v558 = vlaneseq
        %v559 = vshrl.u32 %v558, 7
        %v560 = vsub.s32 3, %v559
        %v561 = vrot.slane %v225, %v560
        %v562 = vlaneseq
        %v563 = vshrl.u32 %v562, 7
        %v564 = vsub.s32 3, %v563
        %v565 = vrot.slane %v226, %v564
        %v566 = vlaneseq
        %v567 = vshrl.u32 %v566, 7
        %v568 = vsub.s32 3, %v567
        %v569 = vrot.slane %v227, %v568
        %v570 = vlaneseq
        %v571 = vshrl.u32 %v570, 7
        %v572 = vsub.s32 3, %v571
        %v573 = vrot.slane %v228, %v572
        %v574 = vlaneseq
        %v575 = vshrl.u32 %v574, 7
        %v576 = vsub.s32 3, %v575
        %v577 = vrot.slane %v229, %v576
        %v578 = vlaneseq
        %v579 = vshrl.u32 %v578, 7
        %v580 = vsub.s32 3, %v579
        %v581 = vrot.slane %v230, %v580
        %v582 = vlaneseq
        %v583 = vshrl.u32 %v582, 7
        %v584 = vsub.s32 3, %v583
        %v585 = vrot.slane %v231, %v584
        %v586 = vlaneseq
        %v587 = vshrl.u32 %v586, 7
        %v588 = vsub.s32 3, %v587
        %v589 = vrot.slane %v232, %v588
        %v590 = vlaneseq
        %v591 = vshrl.u32 %v590, 7
        %v592 = vsub.s32 3, %v591
        %v593 = vrot.slane %v233, %v592
        %594 = vset.pattern.permute.xlu0 2
        %595 = vperm.xlu0 %594, %v234
        %v596 = vpop.permute.xlu0 %595
        %598 = vset.pattern.permute.xlu0 2
        %599 = vperm.xlu0 %598, %v235
        %v600 = vpop.permute.xlu0 %599
        %602 = vset.pattern.permute.xlu0 2
        %603 = vperm.xlu0 %602, %v236
        %v604 = vpop.permute.xlu0 %603
        %606 = vset.pattern.permute.xlu0 2
        %607 = vperm.xlu0 %606, %v237
        %v608 = vpop.permute.xlu0 %607
        %v610 = vsub.f32 %v533, %v596
        %v611 = vsub.f32 %v537, %v596
        %v612 = vsub.f32 %v541, %v596
        %v613 = vsub.f32 %v545, %v596
        %v614 = vsub.f32 %v549, %v596
        %v615 = vsub.f32 %v553, %v596
        %v616 = vsub.f32 %v557, %v596
        %v617 = vsub.f32 %v561, %v596
        %v618 = vsub.f32 %v565, %v596
        %v619 = vsub.f32 %v569, %v596
        %v620 = vsub.f32 %v573, %v596
        %v621 = vsub.f32 %v577, %v596
        %v622 = vsub.f32 %v581, %v596
        %v623 = vsub.f32 %v585, %v596
        %v624 = vsub.f32 %v589, %v596
        %v625 = vsub.f32 %v593, %v596
        %v626 = vsub.f32 %v533, %v600
        %v627 = vsub.f32 %v537, %v600
        %v628 = vsub.f32 %v541, %v600
        %v629 = vsub.f32 %v545, %v600
        %v630 = vsub.f32 %v549, %v600
        %v631 = vsub.f32 %v553, %v600
        %v632 = vsub.f32 %v557, %v600
        %v633 = vsub.f32 %v561, %v600
        %v634 = vsub.f32 %v565, %v600
        %v635 = vsub.f32 %v569, %v600
        %v636 = vsub.f32 %v573, %v600
        %v637 = vsub.f32 %v577, %v600
        %v638 = vsub.f32 %v581, %v600
        %v639 = vsub.f32 %v585, %v600
        %v640 = vsub.f32 %v589, %v600
        %v641 = vsub.f32 %v593, %v600
        %v642 = vsub.f32 %v533, %v604
        %v643 = vsub.f32 %v537, %v604
        %v644 = vsub.f32 %v541, %v604
        %v645 = vsub.f32 %v545, %v604
        %v646 = vsub.f32 %v549, %v604
        %v647 = vsub.f32 %v553, %v604
        %v648 = vsub.f32 %v557, %v604
        %v649 = vsub.f32 %v561, %v604
        %v650 = vsub.f32 %v565, %v604
        %v651 = vsub.f32 %v569, %v604
        %v652 = vsub.f32 %v573, %v604
        %v653 = vsub.f32 %v577, %v604
        %v654 = vsub.f32 %v581, %v604
        %v655 = vsub.f32 %v585, %v604
        %v656 = vsub.f32 %v589, %v604
        %v657 = vsub.f32 %v593, %v604
        %v658 = vsub.f32 %v533, %v608
        %v659 = vsub.f32 %v537, %v608
        %v660 = vsub.f32 %v541, %v608
        %v661 = vsub.f32 %v545, %v608
        %v662 = vsub.f32 %v549, %v608
        %v663 = vsub.f32 %v553, %v608
        %v664 = vsub.f32 %v557, %v608
        %v665 = vsub.f32 %v561, %v608
        %v666 = vsub.f32 %v565, %v608
        %v667 = vsub.f32 %v569, %v608
        %v668 = vsub.f32 %v573, %v608
        %v669 = vsub.f32 %v577, %v608
        %v670 = vsub.f32 %v581, %v608
        %v671 = vsub.f32 %v585, %v608
        %v672 = vsub.f32 %v589, %v608
        %v673 = vsub.f32 %v593, %v608
        %v674 = vmul.f32 %v322, %v322
        %v675 = vmul.f32 %v323, %v323
        %v676 = vmul.f32 %v324, %v324
        %v677 = vmul.f32 %v325, %v325
        %v678 = vmul.f32 %v326, %v326
        %v679 = vmul.f32 %v327, %v327
        %v680 = vmul.f32 %v328, %v328
        %v681 = vmul.f32 %v329, %v329
        %v682 = vmul.f32 %v330, %v330
        %v683 = vmul.f32 %v331, %v331
        %v684 = vmul.f32 %v332, %v332
        %v685 = vmul.f32 %v333, %v333
        %v686 = vmul.f32 %v334, %v334
        %v687 = vmul.f32 %v335, %v335
        %v688 = vmul.f32 %v336, %v336
        %v689 = vmul.f32 %v337, %v337
        %v690 = vmul.f32 %v338, %v338
        %v691 = vmul.f32 %v339, %v339
        %v692 = vmul.f32 %v340, %v340
        %v693 = vmul.f32 %v341, %v341
        %v694 = vmul.f32 %v342, %v342
        %v695 = vmul.f32 %v343, %v343
        %v696 = vmul.f32 %v344, %v344
        %v697 = vmul.f32 %v345, %v345
        %v698 = vmul.f32 %v346, %v346
        %v699 = vmul.f32 %v347, %v347
        %v700 = vmul.f32 %v348, %v348
        %v701 = vmul.f32 %v349, %v349
        %v702 = vmul.f32 %v350, %v350
        %v703 = vmul.f32 %v351, %v351
        %v704 = vmul.f32 %v352, %v352
        %v705 = vmul.f32 %v353, %v353
        %v706 = vmul.f32 %v354, %v354
        %v707 = vmul.f32 %v355, %v355
        %v708 = vmul.f32 %v356, %v356
        %v709 = vmul.f32 %v357, %v357
        %v710 = vmul.f32 %v358, %v358
        %v711 = vmul.f32 %v359, %v359
        %v712 = vmul.f32 %v360, %v360
        %v713 = vmul.f32 %v361, %v361
        %v714 = vmul.f32 %v362, %v362
        %v715 = vmul.f32 %v363, %v363
        %v716 = vmul.f32 %v364, %v364
        %v717 = vmul.f32 %v365, %v365
        %v718 = vmul.f32 %v366, %v366
        %v719 = vmul.f32 %v367, %v367
        %v720 = vmul.f32 %v368, %v368
        %v721 = vmul.f32 %v369, %v369
        %v722 = vmul.f32 %v370, %v370
        %v723 = vmul.f32 %v371, %v371
        %v724 = vmul.f32 %v372, %v372
        %v725 = vmul.f32 %v373, %v373
        %v726 = vmul.f32 %v374, %v374
        %v727 = vmul.f32 %v375, %v375
        %v728 = vmul.f32 %v376, %v376
        %v729 = vmul.f32 %v377, %v377
        %v730 = vmul.f32 %v378, %v378
        %v731 = vmul.f32 %v379, %v379
        %v732 = vmul.f32 %v380, %v380
        %v733 = vmul.f32 %v381, %v381
        %v734 = vmul.f32 %v382, %v382
        %v735 = vmul.f32 %v383, %v383
        %v736 = vmul.f32 %v384, %v384
        %v737 = vmul.f32 %v385, %v385
        %v738 = vmul.f32 %v466, %v466
        %v739 = vmul.f32 %v467, %v467
        %v740 = vmul.f32 %v468, %v468
        %v741 = vmul.f32 %v469, %v469
        %v742 = vmul.f32 %v470, %v470
        %v743 = vmul.f32 %v471, %v471
        %v744 = vmul.f32 %v472, %v472
        %v745 = vmul.f32 %v473, %v473
        %v746 = vmul.f32 %v474, %v474
        %v747 = vmul.f32 %v475, %v475
        %v748 = vmul.f32 %v476, %v476
        %v749 = vmul.f32 %v477, %v477
        %v750 = vmul.f32 %v478, %v478
        %v751 = vmul.f32 %v479, %v479
        %v752 = vmul.f32 %v480, %v480
        %v753 = vmul.f32 %v481, %v481
        %v754 = vmul.f32 %v482, %v482
        %v755 = vmul.f32 %v483, %v483
        %v756 = vmul.f32 %v484, %v484
        %v757 = vmul.f32 %v485, %v485
        %v758 = vmul.f32 %v486, %v486
        %v759 = vmul.f32 %v487, %v487
        %v760 = vmul.f32 %v488, %v488
        %v761 = vmul.f32 %v489, %v489
        %v762 = vmul.f32 %v490, %v490
        %v763 = vmul.f32 %v491, %v491
        %v764 = vmul.f32 %v492, %v492
        %v765 = vmul.f32 %v493, %v493
        %v766 = vmul.f32 %v494, %v494
        %v767 = vmul.f32 %v495, %v495
        %v768 = vmul.f32 %v496, %v496
        %v769 = vmul.f32 %v497, %v497
        %v770 = vmul.f32 %v498, %v498
        %v771 = vmul.f32 %v499, %v499
        %v772 = vmul.f32 %v500, %v500
        %v773 = vmul.f32 %v501, %v501
        %v774 = vmul.f32 %v502, %v502
        %v775 = vmul.f32 %v503, %v503
        %v776 = vmul.f32 %v504, %v504
        %v777 = vmul.f32 %v505, %v505
        %v778 = vmul.f32 %v506, %v506
        %v779 = vmul.f32 %v507, %v507
        %v780 = vmul.f32 %v508, %v508
        %v781 = vmul.f32 %v509, %v509
        %v782 = vmul.f32 %v510, %v510
        %v783 = vmul.f32 %v511, %v511
        %v784 = vmul.f32 %v512, %v512
        %v785 = vmul.f32 %v513, %v513
        %v786 = vmul.f32 %v514, %v514
        %v787 = vmul.f32 %v515, %v515
        %v788 = vmul.f32 %v516, %v516
        %v789 = vmul.f32 %v517, %v517
        %v790 = vmul.f32 %v518, %v518
        %v791 = vmul.f32 %v519, %v519
        %v792 = vmul.f32 %v520, %v520
        %v793 = vmul.f32 %v521, %v521
        %v794 = vmul.f32 %v522, %v522
        %v795 = vmul.f32 %v523, %v523
        %v796 = vmul.f32 %v524, %v524
        %v797 = vmul.f32 %v525, %v525
        %v798 = vmul.f32 %v526, %v526
        %v799 = vmul.f32 %v527, %v527
        %v800 = vmul.f32 %v528, %v528
        %v801 = vmul.f32 %v529, %v529
        %v802 = vadd.f32 %v674, %v738
        %v803 = vadd.f32 %v675, %v739
        %v804 = vadd.f32 %v676, %v740
        %v805 = vadd.f32 %v677, %v741
        %v806 = vadd.f32 %v678, %v742
        %v807 = vadd.f32 %v679, %v743
        %v808 = vadd.f32 %v680, %v744
        %v809 = vadd.f32 %v681, %v745
        %v810 = vadd.f32 %v682, %v746
        %v811 = vadd.f32 %v683, %v747
        %v812 = vadd.f32 %v684, %v748
        %v813 = vadd.f32 %v685, %v749
        %v814 = vadd.f32 %v686, %v750
        %v815 = vadd.f32 %v687, %v751
        %v816 = vadd.f32 %v688, %v752
        %v817 = vadd.f32 %v689, %v753
        %v818 = vadd.f32 %v690, %v754
        %v819 = vadd.f32 %v691, %v755
        %v820 = vadd.f32 %v692, %v756
        %v821 = vadd.f32 %v693, %v757
        %v822 = vadd.f32 %v694, %v758
        %v823 = vadd.f32 %v695, %v759
        %v824 = vadd.f32 %v696, %v760
        %v825 = vadd.f32 %v697, %v761
        %v826 = vadd.f32 %v698, %v762
        %v827 = vadd.f32 %v699, %v763
        %v828 = vadd.f32 %v700, %v764
        %v829 = vadd.f32 %v701, %v765
        %v830 = vadd.f32 %v702, %v766
        %v831 = vadd.f32 %v703, %v767
        %v832 = vadd.f32 %v704, %v768
        %v833 = vadd.f32 %v705, %v769
        %v834 = vadd.f32 %v706, %v770
        %v835 = vadd.f32 %v707, %v771
        %v836 = vadd.f32 %v708, %v772
        %v837 = vadd.f32 %v709, %v773
        %v838 = vadd.f32 %v710, %v774
        %v839 = vadd.f32 %v711, %v775
        %v840 = vadd.f32 %v712, %v776
        %v841 = vadd.f32 %v713, %v777
        %v842 = vadd.f32 %v714, %v778
        %v843 = vadd.f32 %v715, %v779
        %v844 = vadd.f32 %v716, %v780
        %v845 = vadd.f32 %v717, %v781
        %v846 = vadd.f32 %v718, %v782
        %v847 = vadd.f32 %v719, %v783
        %v848 = vadd.f32 %v720, %v784
        %v849 = vadd.f32 %v721, %v785
        %v850 = vadd.f32 %v722, %v786
        %v851 = vadd.f32 %v723, %v787
        %v852 = vadd.f32 %v724, %v788
        %v853 = vadd.f32 %v725, %v789
        %v854 = vadd.f32 %v726, %v790
        %v855 = vadd.f32 %v727, %v791
        %v856 = vadd.f32 %v728, %v792
        %v857 = vadd.f32 %v729, %v793
        %v858 = vadd.f32 %v730, %v794
        %v859 = vadd.f32 %v731, %v795
        %v860 = vadd.f32 %v732, %v796
        %v861 = vadd.f32 %v733, %v797
        %v862 = vadd.f32 %v734, %v798
        %v863 = vadd.f32 %v735, %v799
        %v864 = vadd.f32 %v736, %v800
        %v865 = vadd.f32 %v737, %v801
        %v866 = vmul.f32 %v610, %v610
        %v867 = vmul.f32 %v611, %v611
        %v868 = vmul.f32 %v612, %v612
        %v869 = vmul.f32 %v613, %v613
        %v870 = vmul.f32 %v614, %v614
        %v871 = vmul.f32 %v615, %v615
        %v872 = vmul.f32 %v616, %v616
        %v873 = vmul.f32 %v617, %v617
        %v874 = vmul.f32 %v618, %v618
        %v875 = vmul.f32 %v619, %v619
        %v876 = vmul.f32 %v620, %v620
        %v877 = vmul.f32 %v621, %v621
        %v878 = vmul.f32 %v622, %v622
        %v879 = vmul.f32 %v623, %v623
        %v880 = vmul.f32 %v624, %v624
        %v881 = vmul.f32 %v625, %v625
        %v882 = vmul.f32 %v626, %v626
        %v883 = vmul.f32 %v627, %v627
        %v884 = vmul.f32 %v628, %v628
        %v885 = vmul.f32 %v629, %v629
        %v886 = vmul.f32 %v630, %v630
        %v887 = vmul.f32 %v631, %v631
        %v888 = vmul.f32 %v632, %v632
        %v889 = vmul.f32 %v633, %v633
        %v890 = vmul.f32 %v634, %v634
        %v891 = vmul.f32 %v635, %v635
        %v892 = vmul.f32 %v636, %v636
        %v893 = vmul.f32 %v637, %v637
        %v894 = vmul.f32 %v638, %v638
        %v895 = vmul.f32 %v639, %v639
        %v896 = vmul.f32 %v640, %v640
        %v897 = vmul.f32 %v641, %v641
        %v898 = vmul.f32 %v642, %v642
        %v899 = vmul.f32 %v643, %v643
        %v900 = vmul.f32 %v644, %v644
        %v901 = vmul.f32 %v645, %v645
        %v902 = vmul.f32 %v646, %v646
        %v903 = vmul.f32 %v647, %v647
        %v904 = vmul.f32 %v648, %v648
        %v905 = vmul.f32 %v649, %v649
        %v906 = vmul.f32 %v650, %v650
        %v907 = vmul.f32 %v651, %v651
        %v908 = vmul.f32 %v652, %v652
        %v909 = vmul.f32 %v653, %v653
        %v910 = vmul.f32 %v654, %v654
        %v911 = vmul.f32 %v655, %v655
        %v912 = vmul.f32 %v656, %v656
        %v913 = vmul.f32 %v657, %v657
        %v914 = vmul.f32 %v658, %v658
        %v915 = vmul.f32 %v659, %v659
        %v916 = vmul.f32 %v660, %v660
        %v917 = vmul.f32 %v661, %v661
        %v918 = vmul.f32 %v662, %v662
        %v919 = vmul.f32 %v663, %v663
        %v920 = vmul.f32 %v664, %v664
        %v921 = vmul.f32 %v665, %v665
        %v922 = vmul.f32 %v666, %v666
        %v923 = vmul.f32 %v667, %v667
        %v924 = vmul.f32 %v668, %v668
        %v925 = vmul.f32 %v669, %v669
        %v926 = vmul.f32 %v670, %v670
        %v927 = vmul.f32 %v671, %v671
        %v928 = vmul.f32 %v672, %v672
        %v929 = vmul.f32 %v673, %v673
        %v930 = vadd.f32 %v802, %v866
        %v931 = vadd.f32 %v803, %v867
        %v932 = vadd.f32 %v804, %v868
        %v933 = vadd.f32 %v805, %v869
        %v934 = vadd.f32 %v806, %v870
        %v935 = vadd.f32 %v807, %v871
        %v936 = vadd.f32 %v808, %v872
        %v937 = vadd.f32 %v809, %v873
        %v938 = vadd.f32 %v810, %v874
        %v939 = vadd.f32 %v811, %v875
        %v940 = vadd.f32 %v812, %v876
        %v941 = vadd.f32 %v813, %v877
        %v942 = vadd.f32 %v814, %v878
        %v943 = vadd.f32 %v815, %v879
        %v944 = vadd.f32 %v816, %v880
        %v945 = vadd.f32 %v817, %v881
        %v946 = vadd.f32 %v818, %v882
        %v947 = vadd.f32 %v819, %v883
        %v948 = vadd.f32 %v820, %v884
        %v949 = vadd.f32 %v821, %v885
        %v950 = vadd.f32 %v822, %v886
        %v951 = vadd.f32 %v823, %v887
        %v952 = vadd.f32 %v824, %v888
        %v953 = vadd.f32 %v825, %v889
        %v954 = vadd.f32 %v826, %v890
        %v955 = vadd.f32 %v827, %v891
        %v956 = vadd.f32 %v828, %v892
        %v957 = vadd.f32 %v829, %v893
        %v958 = vadd.f32 %v830, %v894
        %v959 = vadd.f32 %v831, %v895
        %v960 = vadd.f32 %v832, %v896
        %v961 = vadd.f32 %v833, %v897
        %v962 = vadd.f32 %v834, %v898
        %v963 = vadd.f32 %v835, %v899
        %v964 = vadd.f32 %v836, %v900
        %v965 = vadd.f32 %v837, %v901
        %v966 = vadd.f32 %v838, %v902
        %v967 = vadd.f32 %v839, %v903
        %v968 = vadd.f32 %v840, %v904
        %v969 = vadd.f32 %v841, %v905
        %v970 = vadd.f32 %v842, %v906
        %v971 = vadd.f32 %v843, %v907
        %v972 = vadd.f32 %v844, %v908
        %v973 = vadd.f32 %v845, %v909
        %v974 = vadd.f32 %v846, %v910
        %v975 = vadd.f32 %v847, %v911
        %v976 = vadd.f32 %v848, %v912
        %v977 = vadd.f32 %v849, %v913
        %v978 = vadd.f32 %v850, %v914
        %v979 = vadd.f32 %v851, %v915
        %v980 = vadd.f32 %v852, %v916
        %v981 = vadd.f32 %v853, %v917
        %v982 = vadd.f32 %v854, %v918
        %v983 = vadd.f32 %v855, %v919
        %v984 = vadd.f32 %v856, %v920
        %v985 = vadd.f32 %v857, %v921
        %v986 = vadd.f32 %v858, %v922
        %v987 = vadd.f32 %v859, %v923
        %v988 = vadd.f32 %v860, %v924
        %v989 = vadd.f32 %v861, %v925
        %v990 = vadd.f32 %v862, %v926
        %v991 = vadd.f32 %v863, %v927
        %v992 = vadd.f32 %v864, %v928
        %v993 = vadd.f32 %v865, %v929
        %vm994 = vcmp.eq.f32.partialorder %v930, 0.0
        %vm995 = vcmp.eq.f32.partialorder %v931, 0.0
        %vm996 = vcmp.eq.f32.partialorder %v932, 0.0
        %vm997 = vcmp.eq.f32.partialorder %v933, 0.0
        %vm998 = vcmp.eq.f32.partialorder %v934, 0.0
        %vm999 = vcmp.eq.f32.partialorder %v935, 0.0
        %vm1000 = vcmp.eq.f32.partialorder %v936, 0.0
        %vm1001 = vcmp.eq.f32.partialorder %v937, 0.0
        %vm1002 = vcmp.eq.f32.partialorder %v938, 0.0
        %vm1003 = vcmp.eq.f32.partialorder %v939, 0.0
        %vm1004 = vcmp.eq.f32.partialorder %v940, 0.0
        %vm1005 = vcmp.eq.f32.partialorder %v941, 0.0
        %vm1006 = vcmp.eq.f32.partialorder %v942, 0.0
        %vm1007 = vcmp.eq.f32.partialorder %v943, 0.0
        %vm1008 = vcmp.eq.f32.partialorder %v944, 0.0
        %vm1009 = vcmp.eq.f32.partialorder %v945, 0.0
        %vm1010 = vcmp.eq.f32.partialorder %v946, 0.0
        %vm1011 = vcmp.eq.f32.partialorder %v947, 0.0
        %vm1012 = vcmp.eq.f32.partialorder %v948, 0.0
        %vm1013 = vcmp.eq.f32.partialorder %v949, 0.0
        %vm1014 = vcmp.eq.f32.partialorder %v950, 0.0
        %vm1015 = vcmp.eq.f32.partialorder %v951, 0.0
        %vm1016 = vcmp.eq.f32.partialorder %v952, 0.0
        %vm1017 = vcmp.eq.f32.partialorder %v953, 0.0
        %vm1018 = vcmp.eq.f32.partialorder %v954, 0.0
        %vm1019 = vcmp.eq.f32.partialorder %v955, 0.0
        %vm1020 = vcmp.eq.f32.partialorder %v956, 0.0
        %vm1021 = vcmp.eq.f32.partialorder %v957, 0.0
        %vm1022 = vcmp.eq.f32.partialorder %v958, 0.0
        %vm1023 = vcmp.eq.f32.partialorder %v959, 0.0
        %vm1024 = vcmp.eq.f32.partialorder %v960, 0.0
        %vm1025 = vcmp.eq.f32.partialorder %v961, 0.0
        %vm1026 = vcmp.eq.f32.partialorder %v962, 0.0
        %vm1027 = vcmp.eq.f32.partialorder %v963, 0.0
        %vm1028 = vcmp.eq.f32.partialorder %v964, 0.0
        %vm1029 = vcmp.eq.f32.partialorder %v965, 0.0
        %vm1030 = vcmp.eq.f32.partialorder %v966, 0.0
        %vm1031 = vcmp.eq.f32.partialorder %v967, 0.0
        %vm1032 = vcmp.eq.f32.partialorder %v968, 0.0
        %vm1033 = vcmp.eq.f32.partialorder %v969, 0.0
        %vm1034 = vcmp.eq.f32.partialorder %v970, 0.0
        %vm1035 = vcmp.eq.f32.partialorder %v971, 0.0
        %vm1036 = vcmp.eq.f32.partialorder %v972, 0.0
        %vm1037 = vcmp.eq.f32.partialorder %v973, 0.0
        %vm1038 = vcmp.eq.f32.partialorder %v974, 0.0
        %vm1039 = vcmp.eq.f32.partialorder %v975, 0.0
        %vm1040 = vcmp.eq.f32.partialorder %v976, 0.0
        %vm1041 = vcmp.eq.f32.partialorder %v977, 0.0
        %vm1042 = vcmp.eq.f32.partialorder %v978, 0.0
        %vm1043 = vcmp.eq.f32.partialorder %v979, 0.0
        %vm1044 = vcmp.eq.f32.partialorder %v980, 0.0
        %vm1045 = vcmp.eq.f32.partialorder %v981, 0.0
        %vm1046 = vcmp.eq.f32.partialorder %v982, 0.0
        %vm1047 = vcmp.eq.f32.partialorder %v983, 0.0
        %vm1048 = vcmp.eq.f32.partialorder %v984, 0.0
        %vm1049 = vcmp.eq.f32.partialorder %v985, 0.0
        %vm1050 = vcmp.eq.f32.partialorder %v986, 0.0
        %vm1051 = vcmp.eq.f32.partialorder %v987, 0.0
        %vm1052 = vcmp.eq.f32.partialorder %v988, 0.0
        %vm1053 = vcmp.eq.f32.partialorder %v989, 0.0
        %vm1054 = vcmp.eq.f32.partialorder %v990, 0.0
        %vm1055 = vcmp.eq.f32.partialorder %v991, 0.0
        %vm1056 = vcmp.eq.f32.partialorder %v992, 0.0
        %vm1057 = vcmp.eq.f32.partialorder %v993, 0.0
        %v1058 = vsel %vm994, 1.0, %v930
        %v1059 = vsel %vm995, 1.0, %v931
        %v1060 = vsel %vm996, 1.0, %v932
        %v1061 = vsel %vm997, 1.0, %v933
        %v1062 = vsel %vm998, 1.0, %v934
        %v1063 = vsel %vm999, 1.0, %v935
        %v1064 = vsel %vm1000, 1.0, %v936
        %v1065 = vsel %vm1001, 1.0, %v937
        %v1066 = vsel %vm1002, 1.0, %v938
        %v1067 = vsel %vm1003, 1.0, %v939
        %v1068 = vsel %vm1004, 1.0, %v940
        %v1069 = vsel %vm1005, 1.0, %v941
        %v1070 = vsel %vm1006, 1.0, %v942
        %v1071 = vsel %vm1007, 1.0, %v943
        %v1072 = vsel %vm1008, 1.0, %v944
        %v1073 = vsel %vm1009, 1.0, %v945
        %v1074 = vsel %vm1010, 1.0, %v946
        %v1075 = vsel %vm1011, 1.0, %v947
        %v1076 = vsel %vm1012, 1.0, %v948
        %v1077 = vsel %vm1013, 1.0, %v949
        %v1078 = vsel %vm1014, 1.0, %v950
        %v1079 = vsel %vm1015, 1.0, %v951
        %v1080 = vsel %vm1016, 1.0, %v952
        %v1081 = vsel %vm1017, 1.0, %v953
        %v1082 = vsel %vm1018, 1.0, %v954
        %v1083 = vsel %vm1019, 1.0, %v955
        %v1084 = vsel %vm1020, 1.0, %v956
        %v1085 = vsel %vm1021, 1.0, %v957
        %v1086 = vsel %vm1022, 1.0, %v958
        %v1087 = vsel %vm1023, 1.0, %v959
        %v1088 = vsel %vm1024, 1.0, %v960
        %v1089 = vsel %vm1025, 1.0, %v961
        %v1090 = vsel %vm1026, 1.0, %v962
        %v1091 = vsel %vm1027, 1.0, %v963
        %v1092 = vsel %vm1028, 1.0, %v964
        %v1093 = vsel %vm1029, 1.0, %v965
        %v1094 = vsel %vm1030, 1.0, %v966
        %v1095 = vsel %vm1031, 1.0, %v967
        %v1096 = vsel %vm1032, 1.0, %v968
        %v1097 = vsel %vm1033, 1.0, %v969
        %v1098 = vsel %vm1034, 1.0, %v970
        %v1099 = vsel %vm1035, 1.0, %v971
        %v1100 = vsel %vm1036, 1.0, %v972
        %v1101 = vsel %vm1037, 1.0, %v973
        %v1102 = vsel %vm1038, 1.0, %v974
        %v1103 = vsel %vm1039, 1.0, %v975
        %v1104 = vsel %vm1040, 1.0, %v976
        %v1105 = vsel %vm1041, 1.0, %v977
        %v1106 = vsel %vm1042, 1.0, %v978
        %v1107 = vsel %vm1043, 1.0, %v979
        %v1108 = vsel %vm1044, 1.0, %v980
        %v1109 = vsel %vm1045, 1.0, %v981
        %v1110 = vsel %vm1046, 1.0, %v982
        %v1111 = vsel %vm1047, 1.0, %v983
        %v1112 = vsel %vm1048, 1.0, %v984
        %v1113 = vsel %vm1049, 1.0, %v985
        %v1114 = vsel %vm1050, 1.0, %v986
        %v1115 = vsel %vm1051, 1.0, %v987
        %v1116 = vsel %vm1052, 1.0, %v988
        %v1117 = vsel %vm1053, 1.0, %v989
        %v1118 = vsel %vm1054, 1.0, %v990
        %v1119 = vsel %vm1055, 1.0, %v991
        %v1120 = vsel %vm1056, 1.0, %v992
        %v1121 = vsel %vm1057, 1.0, %v993
        %v1122 = vlog2.pop %v1058
        %v1123 = vmul.f32 %v1122, 0.6931472
        %v1124 = vlog2.pop %v1059
        %v1125 = vmul.f32 %v1124, 0.6931472
        %v1126 = vlog2.pop %v1060
        %v1127 = vmul.f32 %v1126, 0.6931472
        %v1128 = vlog2.pop %v1061
        %v1129 = vmul.f32 %v1128, 0.6931472
        %v1130 = vlog2.pop %v1062
        %v1131 = vmul.f32 %v1130, 0.6931472
        %v1132 = vlog2.pop %v1063
        %v1133 = vmul.f32 %v1132, 0.6931472
        %v1134 = vlog2.pop %v1064
        %v1135 = vmul.f32 %v1134, 0.6931472
        %v1136 = vlog2.pop %v1065
        %v1137 = vmul.f32 %v1136, 0.6931472
        %v1138 = vlog2.pop %v1066
        %v1139 = vmul.f32 %v1138, 0.6931472
        %v1140 = vlog2.pop %v1067
        %v1141 = vmul.f32 %v1140, 0.6931472
        %v1142 = vlog2.pop %v1068
        %v1143 = vmul.f32 %v1142, 0.6931472
        %v1144 = vlog2.pop %v1069
        %v1145 = vmul.f32 %v1144, 0.6931472
        %v1146 = vlog2.pop %v1070
        %v1147 = vmul.f32 %v1146, 0.6931472
        %v1148 = vlog2.pop %v1071
        %v1149 = vmul.f32 %v1148, 0.6931472
        %v1150 = vlog2.pop %v1072
        %v1151 = vmul.f32 %v1150, 0.6931472
        %v1152 = vlog2.pop %v1073
        %v1153 = vmul.f32 %v1152, 0.6931472
        %v1154 = vlog2.pop %v1074
        %v1155 = vmul.f32 %v1154, 0.6931472
        %v1156 = vlog2.pop %v1075
        %v1157 = vmul.f32 %v1156, 0.6931472
        %v1158 = vlog2.pop %v1076
        %v1159 = vmul.f32 %v1158, 0.6931472
        %v1160 = vlog2.pop %v1077
        %v1161 = vmul.f32 %v1160, 0.6931472
        %v1162 = vlog2.pop %v1078
        %v1163 = vmul.f32 %v1162, 0.6931472
        %v1164 = vlog2.pop %v1079
        %v1165 = vmul.f32 %v1164, 0.6931472
        %v1166 = vlog2.pop %v1080
        %v1167 = vmul.f32 %v1166, 0.6931472
        %v1168 = vlog2.pop %v1081
        %v1169 = vmul.f32 %v1168, 0.6931472
        %v1170 = vlog2.pop %v1082
        %v1171 = vmul.f32 %v1170, 0.6931472
        %v1172 = vlog2.pop %v1083
        %v1173 = vmul.f32 %v1172, 0.6931472
        %v1174 = vlog2.pop %v1084
        %v1175 = vmul.f32 %v1174, 0.6931472
        %v1176 = vlog2.pop %v1085
        %v1177 = vmul.f32 %v1176, 0.6931472
        %v1178 = vlog2.pop %v1086
        %v1179 = vmul.f32 %v1178, 0.6931472
        %v1180 = vlog2.pop %v1087
        %v1181 = vmul.f32 %v1180, 0.6931472
        %v1182 = vlog2.pop %v1088
        %v1183 = vmul.f32 %v1182, 0.6931472
        %v1184 = vlog2.pop %v1089
        %v1185 = vmul.f32 %v1184, 0.6931472
        %v1186 = vlog2.pop %v1090
        %v1187 = vmul.f32 %v1186, 0.6931472
        %v1188 = vlog2.pop %v1091
        %v1189 = vmul.f32 %v1188, 0.6931472
        %v1190 = vlog2.pop %v1092
        %v1191 = vmul.f32 %v1190, 0.6931472
        %v1192 = vlog2.pop %v1093
        %v1193 = vmul.f32 %v1192, 0.6931472
        %v1194 = vlog2.pop %v1094
        %v1195 = vmul.f32 %v1194, 0.6931472
        %v1196 = vlog2.pop %v1095
        %v1197 = vmul.f32 %v1196, 0.6931472
        %v1198 = vlog2.pop %v1096
        %v1199 = vmul.f32 %v1198, 0.6931472
        %v1200 = vlog2.pop %v1097
        %v1201 = vmul.f32 %v1200, 0.6931472
        %v1202 = vlog2.pop %v1098
        %v1203 = vmul.f32 %v1202, 0.6931472
        %v1204 = vlog2.pop %v1099
        %v1205 = vmul.f32 %v1204, 0.6931472
        %v1206 = vlog2.pop %v1100
        %v1207 = vmul.f32 %v1206, 0.6931472
        %v1208 = vlog2.pop %v1101
        %v1209 = vmul.f32 %v1208, 0.6931472
        %v1210 = vlog2.pop %v1102
        %v1211 = vmul.f32 %v1210, 0.6931472
        %v1212 = vlog2.pop %v1103
        %v1213 = vmul.f32 %v1212, 0.6931472
        %v1214 = vlog2.pop %v1104
        %v1215 = vmul.f32 %v1214, 0.6931472
        %v1216 = vlog2.pop %v1105
        %v1217 = vmul.f32 %v1216, 0.6931472
        %v1218 = vlog2.pop %v1106
        %v1219 = vmul.f32 %v1218, 0.6931472
        %v1220 = vlog2.pop %v1107
        %v1221 = vmul.f32 %v1220, 0.6931472
        %v1222 = vlog2.pop %v1108
        %v1223 = vmul.f32 %v1222, 0.6931472
        %v1224 = vlog2.pop %v1109
        %v1225 = vmul.f32 %v1224, 0.6931472
        %v1226 = vlog2.pop %v1110
        %v1227 = vmul.f32 %v1226, 0.6931472
        %v1228 = vlog2.pop %v1111
        %v1229 = vmul.f32 %v1228, 0.6931472
        %v1230 = vlog2.pop %v1112
        %v1231 = vmul.f32 %v1230, 0.6931472
        %v1232 = vlog2.pop %v1113
        %v1233 = vmul.f32 %v1232, 0.6931472
        %v1234 = vlog2.pop %v1114
        %v1235 = vmul.f32 %v1234, 0.6931472
        %v1236 = vlog2.pop %v1115
        %v1237 = vmul.f32 %v1236, 0.6931472
        %v1238 = vlog2.pop %v1116
        %v1239 = vmul.f32 %v1238, 0.6931472
        %v1240 = vlog2.pop %v1117
        %v1241 = vmul.f32 %v1240, 0.6931472
        %v1242 = vlog2.pop %v1118
        %v1243 = vmul.f32 %v1242, 0.6931472
        %v1244 = vlog2.pop %v1119
        %v1245 = vmul.f32 %v1244, 0.6931472
        %v1246 = vlog2.pop %v1120
        %v1247 = vmul.f32 %v1246, 0.6931472
        %v1248 = vlog2.pop %v1121
        %v1249 = vmul.f32 %v1248, 0.6931472
        %v1250 = vmul.f32 %v1058, %v1123
        %v1251 = vmul.f32 %v1059, %v1125
        %v1252 = vmul.f32 %v1060, %v1127
        %v1253 = vmul.f32 %v1061, %v1129
        %v1254 = vmul.f32 %v1062, %v1131
        %v1255 = vmul.f32 %v1063, %v1133
        %v1256 = vmul.f32 %v1064, %v1135
        %v1257 = vmul.f32 %v1065, %v1137
        %v1258 = vmul.f32 %v1066, %v1139
        %v1259 = vmul.f32 %v1067, %v1141
        %v1260 = vmul.f32 %v1068, %v1143
        %v1261 = vmul.f32 %v1069, %v1145
        %v1262 = vmul.f32 %v1070, %v1147
        %v1263 = vmul.f32 %v1071, %v1149
        %v1264 = vmul.f32 %v1072, %v1151
        %v1265 = vmul.f32 %v1073, %v1153
        %v1266 = vmul.f32 %v1074, %v1155
        %v1267 = vmul.f32 %v1075, %v1157
        %v1268 = vmul.f32 %v1076, %v1159
        %v1269 = vmul.f32 %v1077, %v1161
        %v1270 = vmul.f32 %v1078, %v1163
        %v1271 = vmul.f32 %v1079, %v1165
        %v1272 = vmul.f32 %v1080, %v1167
        %v1273 = vmul.f32 %v1081, %v1169
        %v1274 = vmul.f32 %v1082, %v1171
        %v1275 = vmul.f32 %v1083, %v1173
        %v1276 = vmul.f32 %v1084, %v1175
        %v1277 = vmul.f32 %v1085, %v1177
        %v1278 = vmul.f32 %v1086, %v1179
        %v1279 = vmul.f32 %v1087, %v1181
        %v1280 = vmul.f32 %v1088, %v1183
        %v1281 = vmul.f32 %v1089, %v1185
        %v1282 = vmul.f32 %v1090, %v1187
        %v1283 = vmul.f32 %v1091, %v1189
        %v1284 = vmul.f32 %v1092, %v1191
        %v1285 = vmul.f32 %v1093, %v1193
        %v1286 = vmul.f32 %v1094, %v1195
        %v1287 = vmul.f32 %v1095, %v1197
        %v1288 = vmul.f32 %v1096, %v1199
        %v1289 = vmul.f32 %v1097, %v1201
        %v1290 = vmul.f32 %v1098, %v1203
        %v1291 = vmul.f32 %v1099, %v1205
        %v1292 = vmul.f32 %v1100, %v1207
        %v1293 = vmul.f32 %v1101, %v1209
        %v1294 = vmul.f32 %v1102, %v1211
        %v1295 = vmul.f32 %v1103, %v1213
        %v1296 = vmul.f32 %v1104, %v1215
        %v1297 = vmul.f32 %v1105, %v1217
        %v1298 = vmul.f32 %v1106, %v1219
        %v1299 = vmul.f32 %v1107, %v1221
        %v1300 = vmul.f32 %v1108, %v1223
        %v1301 = vmul.f32 %v1109, %v1225
        %v1302 = vmul.f32 %v1110, %v1227
        %v1303 = vmul.f32 %v1111, %v1229
        %v1304 = vmul.f32 %v1112, %v1231
        %v1305 = vmul.f32 %v1113, %v1233
        %v1306 = vmul.f32 %v1114, %v1235
        %v1307 = vmul.f32 %v1115, %v1237
        %v1308 = vmul.f32 %v1116, %v1239
        %v1309 = vmul.f32 %v1117, %v1241
        %v1310 = vmul.f32 %v1118, %v1243
        %v1311 = vmul.f32 %v1119, %v1245
        %v1312 = vmul.f32 %v1120, %v1247
        %v1313 = vmul.f32 %v1121, %v1249
        %v1314 = vld [vmem:[%s0] sm:$0xff]
        %v1315 = vld [vmem:[%s1] sm:$0xff]
        %vm1316 = vcmask 64512
        %v1318 = vsel %vm1316, %v1315, 0
        %1320 = vmatprep.subr.mxu0 %v219
        %1321 = vmatpush1.msra.mxu0 %v218
        %1322 = vmatprep.subr.mxu0 0.0
        %1323 = vmatpush1.msra.mxu0 0.0
        %1324 = vmatprep.subr.mxu0 0.0
        %1325 = vmatpush1.msra.mxu0 0.0
        %1326 = vmatprep.subr.mxu0 0.0
        %1327 = vmatpush1.msra.mxu0 0.0
        %1328 = vmatprep.subr.mxu0 0.0
        %1329 = vmatpush1.msra.mxu0 0.0
        %1330 = vmatprep.subr.mxu0 0.0
        %1331 = vmatpush1.msra.mxu0 0.0
        %1332 = vmatprep.subr.mxu0 0.0
        %1333 = vmatpush1.msra.mxu0 0.0
        %1334 = vmatprep.subr.mxu0 0.0
        %1335 = vmatpush1.msra.mxu0 0.0
        %1336 = vmatprep.subr.mxu0 0.0
        %1337 = vmatpush1.msra.mxu0 0.0
        %1338 = vmatprep.subr.mxu0 0.0
        %1339 = vmatpush1.msra.mxu0 0.0
        %1340 = vmatprep.subr.mxu0 0.0
        %1341 = vmatpush1.msra.mxu0 0.0
        %1342 = vmatprep.subr.mxu0 0.0
        %1343 = vmatpush1.msra.mxu0 0.0
        %1344 = vmatprep.subr.mxu0 0.0
        %1345 = vmatpush1.msra.mxu0 0.0
        %1346 = vmatprep.subr.mxu0 0.0
        %1347 = vmatpush1.msra.mxu0 0.0
        %1348 = vmatprep.subr.mxu0 0.0
        %1349 = vmatpush1.msra.mxu0 0.0
        %1350 = vmatprep.subr.mxu0 0.0
        %1351 = vmatpush1.msra.mxu0 0.0
        %1352 = vmatprep.subr.mxu0 0.0
        %1353 = vmatpush1.msra.mxu0 0.0
        %1354 = vmatprep.subr.mxu0 0.0
        %1355 = vmatpush1.msra.mxu0 0.0
        %1356 = vmatprep.subr.mxu0 0.0
        %1357 = vmatpush1.msra.mxu0 0.0
        %1358 = vmatprep.subr.mxu0 0.0
        %1359 = vmatpush1.msra.mxu0 0.0
        %1360 = vmatprep.subr.mxu0 0.0
        %1361 = vmatpush1.msra.mxu0 0.0
        %1362 = vmatprep.subr.mxu0 0.0
        %1363 = vmatpush1.msra.mxu0 0.0
        %1364 = vmatprep.subr.mxu0 0.0
        %1365 = vmatpush1.msra.mxu0 0.0
        %1366 = vmatprep.subr.mxu0 0.0
        %1367 = vmatpush1.msra.mxu0 0.0
        %1368 = vmatprep.subr.mxu0 0.0
        %1369 = vmatpush1.msra.mxu0 0.0
        %1370 = vmatprep.subr.mxu0 0.0
        %1371 = vmatpush1.msra.mxu0 0.0
        %1372 = vmatprep.subr.mxu0 0.0
        %1373 = vmatpush1.msra.mxu0 0.0
        %1374 = vmatprep.subr.mxu0 0.0
        %1375 = vmatpush1.msra.mxu0 0.0
        %1376 = vmatprep.subr.mxu0 0.0
        %1377 = vmatpush1.msra.mxu0 0.0
        %1378 = vmatprep.subr.mxu0 0.0
        %1379 = vmatpush1.msra.mxu0 0.0
        %1380 = vmatprep.subr.mxu0 0.0
        %1381 = vmatpush1.msra.mxu0 0.0
        %1382 = vmatprep.subr.mxu0 0.0
        %1383 = vmatpush1.msra.mxu0 0.0
        %1384 = vmatprep.mubr.f32.mxu0 0.0
        %1385 = vmatmul.mubr.f32.gmra.mrb[0].mxu0 %v1318
        %v1386 = vpop.f32.mrb[0].mxu0
        %v1387 = vadd.f32 0.0, %v1386
        %v1388 = vpop.f32.mrb[0].mxu0
        %v1389 = vadd.f32 0.0, %v1388
        %1390 = vdwg.mxu0
        %1391 = vmatprep.subr.mxu0 %v221
        %1392 = vmatpush1.msra.mxu0 %v220
        %1393 = vmatprep.subr.mxu0 0.0
        %1394 = vmatpush1.msra.mxu0 0.0
        %1395 = vmatprep.subr.mxu0 0.0
        %1396 = vmatpush1.msra.mxu0 0.0
        %1397 = vmatprep.subr.mxu0 0.0
        %1398 = vmatpush1.msra.mxu0 0.0
        %1399 = vmatprep.subr.mxu0 0.0
        %1400 = vmatpush1.msra.mxu0 0.0
        %1401 = vmatprep.subr.mxu0 0.0
        %1402 = vmatpush1.msra.mxu0 0.0
        %1403 = vmatprep.subr.mxu0 0.0
        %1404 = vmatpush1.msra.mxu0 0.0
        %1405 = vmatprep.subr.mxu0 0.0
        %1406 = vmatpush1.msra.mxu0 0.0
        %1407 = vmatprep.subr.mxu0 0.0
        %1408 = vmatpush1.msra.mxu0 0.0
        %1409 = vmatprep.subr.mxu0 0.0
        %1410 = vmatpush1.msra.mxu0 0.0
        %1411 = vmatprep.subr.mxu0 0.0
        %1412 = vmatpush1.msra.mxu0 0.0
        %1413 = vmatprep.subr.mxu0 0.0
        %1414 = vmatpush1.msra.mxu0 0.0
        %1415 = vmatprep.subr.mxu0 0.0
        %1416 = vmatpush1.msra.mxu0 0.0
        %1417 = vmatprep.subr.mxu0 0.0
        %1418 = vmatpush1.msra.mxu0 0.0
        %1419 = vmatprep.subr.mxu0 0.0
        %1420 = vmatpush1.msra.mxu0 0.0
        %1421 = vmatprep.subr.mxu0 0.0
        %1422 = vmatpush1.msra.mxu0 0.0
        %1423 = vmatprep.subr.mxu0 0.0
        %1424 = vmatpush1.msra.mxu0 0.0
        %1425 = vmatprep.subr.mxu0 0.0
        %1426 = vmatpush1.msra.mxu0 0.0
        %1427 = vmatprep.subr.mxu0 0.0
        %1428 = vmatpush1.msra.mxu0 0.0
        %1429 = vmatprep.subr.mxu0 0.0
        %1430 = vmatpush1.msra.mxu0 0.0
        %1431 = vmatprep.subr.mxu0 0.0
        %1432 = vmatpush1.msra.mxu0 0.0
        %1433 = vmatprep.subr.mxu0 0.0
        %1434 = vmatpush1.msra.mxu0 0.0
        %1435 = vmatprep.subr.mxu0 0.0
        %1436 = vmatpush1.msra.mxu0 0.0
        %1437 = vmatprep.subr.mxu0 0.0
        %1438 = vmatpush1.msra.mxu0 0.0
        %1439 = vmatprep.subr.mxu0 0.0
        %1440 = vmatpush1.msra.mxu0 0.0
        %1441 = vmatprep.subr.mxu0 0.0
        %1442 = vmatpush1.msra.mxu0 0.0
        %1443 = vmatprep.subr.mxu0 0.0
        %1444 = vmatpush1.msra.mxu0 0.0
        %1445 = vmatprep.subr.mxu0 0.0
        %1446 = vmatpush1.msra.mxu0 0.0
        %1447 = vmatprep.subr.mxu0 0.0
        %1448 = vmatpush1.msra.mxu0 0.0
        %1449 = vmatprep.subr.mxu0 0.0
        %1450 = vmatpush1.msra.mxu0 0.0
        %1451 = vmatprep.subr.mxu0 0.0
        %1452 = vmatpush1.msra.mxu0 0.0
        %1453 = vmatprep.subr.mxu0 0.0
        %1454 = vmatpush1.msra.mxu0 0.0
        %1455 = vmatprep.mubr.f32.mxu0 0.0
        %1456 = vmatmul.mubr.f32.gmra.mrb[0].mxu0 %v1318
        %v1457 = vpop.f32.mrb[0].mxu0
        %v1458 = vadd.f32 0.0, %v1457
        %v1459 = vpop.f32.mrb[0].mxu0
        %v1460 = vadd.f32 0.0, %v1459
        %1461 = vdwg.mxu0
        %1462 = vmatprep.subr.mxu0 %v223
        %1463 = vmatpush1.msra.mxu0 %v222
        %1464 = vmatprep.subr.mxu0 0.0
        %1465 = vmatpush1.msra.mxu0 0.0
        %1466 = vmatprep.subr.mxu0 0.0
        %1467 = vmatpush1.msra.mxu0 0.0
        %1468 = vmatprep.subr.mxu0 0.0
        %1469 = vmatpush1.msra.mxu0 0.0
        %1470 = vmatprep.subr.mxu0 0.0
        %1471 = vmatpush1.msra.mxu0 0.0
        %1472 = vmatprep.subr.mxu0 0.0
        %1473 = vmatpush1.msra.mxu0 0.0
        %1474 = vmatprep.subr.mxu0 0.0
        %1475 = vmatpush1.msra.mxu0 0.0
        %1476 = vmatprep.subr.mxu0 0.0
        %1477 = vmatpush1.msra.mxu0 0.0
        %1478 = vmatprep.subr.mxu0 0.0
        %1479 = vmatpush1.msra.mxu0 0.0
        %1480 = vmatprep.subr.mxu0 0.0
        %1481 = vmatpush1.msra.mxu0 0.0
        %1482 = vmatprep.subr.mxu0 0.0
        %1483 = vmatpush1.msra.mxu0 0.0
        %1484 = vmatprep.subr.mxu0 0.0
        %1485 = vmatpush1.msra.mxu0 0.0
        %1486 = vmatprep.subr.mxu0 0.0
        %1487 = vmatpush1.msra.mxu0 0.0
        %1488 = vmatprep.subr.mxu0 0.0
        %1489 = vmatpush1.msra.mxu0 0.0
        %1490 = vmatprep.subr.mxu0 0.0
        %1491 = vmatpush1.msra.mxu0 0.0
        %1492 = vmatprep.subr.mxu0 0.0
        %1493 = vmatpush1.msra.mxu0 0.0
        %1494 = vmatprep.subr.mxu0 0.0
        %1495 = vmatpush1.msra.mxu0 0.0
        %1496 = vmatprep.subr.mxu0 0.0
        %1497 = vmatpush1.msra.mxu0 0.0
        %1498 = vmatprep.subr.mxu0 0.0
        %1499 = vmatpush1.msra.mxu0 0.0
        %1500 = vmatprep.subr.mxu0 0.0
        %1501 = vmatpush1.msra.mxu0 0.0
        %1502 = vmatprep.subr.mxu0 0.0
        %1503 = vmatpush1.msra.mxu0 0.0
        %1504 = vmatprep.subr.mxu0 0.0
        %1505 = vmatpush1.msra.mxu0 0.0
        %1506 = vmatprep.subr.mxu0 0.0
        %1507 = vmatpush1.msra.mxu0 0.0
        %1508 = vmatprep.subr.mxu0 0.0
        %1509 = vmatpush1.msra.mxu0 0.0
        %1510 = vmatprep.subr.mxu0 0.0
        %1511 = vmatpush1.msra.mxu0 0.0
        %1512 = vmatprep.subr.mxu0 0.0
        %1513 = vmatpush1.msra.mxu0 0.0
        %1514 = vmatprep.subr.mxu0 0.0
        %1515 = vmatpush1.msra.mxu0 0.0
        %1516 = vmatprep.subr.mxu0 0.0
        %1517 = vmatpush1.msra.mxu0 0.0
        %1518 = vmatprep.subr.mxu0 0.0
        %1519 = vmatpush1.msra.mxu0 0.0
        %1520 = vmatprep.subr.mxu0 0.0
        %1521 = vmatpush1.msra.mxu0 0.0
        %1522 = vmatprep.subr.mxu0 0.0
        %1523 = vmatpush1.msra.mxu0 0.0
        %1524 = vmatprep.subr.mxu0 0.0
        %1525 = vmatpush1.msra.mxu0 0.0
        %1526 = vmatprep.mubr.f32.mxu0 0.0
        %1527 = vmatmul.mubr.f32.gmra.mrb[0].mxu0 %v1318
        %v1528 = vpop.f32.mrb[0].mxu0
        %v1529 = vadd.f32 0.0, %v1528
        %v1530 = vpop.f32.mrb[0].mxu0
        %v1531 = vadd.f32 0.0, %v1530
        %1532 = vdwg.mxu0
        %1533 = vmatprep.subr.mxu0 %v225
        %1534 = vmatpush1.msra.mxu0 %v224
        %1535 = vmatprep.subr.mxu0 0.0
        %1536 = vmatpush1.msra.mxu0 0.0
        %1537 = vmatprep.subr.mxu0 0.0
        %1538 = vmatpush1.msra.mxu0 0.0
        %1539 = vmatprep.subr.mxu0 0.0
        %1540 = vmatpush1.msra.mxu0 0.0
        %1541 = vmatprep.subr.mxu0 0.0
        %1542 = vmatpush1.msra.mxu0 0.0
        %1543 = vmatprep.subr.mxu0 0.0
        %1544 = vmatpush1.msra.mxu0 0.0
        %1545 = vmatprep.subr.mxu0 0.0
        %1546 = vmatpush1.msra.mxu0 0.0
        %1547 = vmatprep.subr.mxu0 0.0
        %1548 = vmatpush1.msra.mxu0 0.0
        %1549 = vmatprep.subr.mxu0 0.0
        %1550 = vmatpush1.msra.mxu0 0.0
        %1551 = vmatprep.subr.mxu0 0.0
        %1552 = vmatpush1.msra.mxu0 0.0
        %1553 = vmatprep.subr.mxu0 0.0
        %1554 = vmatpush1.msra.mxu0 0.0
        %1555 = vmatprep.subr.mxu0 0.0
        %1556 = vmatpush1.msra.mxu0 0.0
        %1557 = vmatprep.subr.mxu0 0.0
        %1558 = vmatpush1.msra.mxu0 0.0
        %1559 = vmatprep.subr.mxu0 0.0
        %1560 = vmatpush1.msra.mxu0 0.0
        %1561 = vmatprep.subr.mxu0 0.0
        %1562 = vmatpush1.msra.mxu0 0.0
        %1563 = vmatprep.subr.mxu0 0.0
        %1564 = vmatpush1.msra.mxu0 0.0
        %1565 = vmatprep.subr.mxu0 0.0
        %1566 = vmatpush1.msra.mxu0 0.0
        %1567 = vmatprep.subr.mxu0 0.0
        %1568 = vmatpush1.msra.mxu0 0.0
        %1569 = vmatprep.subr.mxu0 0.0
        %1570 = vmatpush1.msra.mxu0 0.0
        %1571 = vmatprep.subr.mxu0 0.0
        %1572 = vmatpush1.msra.mxu0 0.0
        %1573 = vmatprep.subr.mxu0 0.0
        %1574 = vmatpush1.msra.mxu0 0.0
        %1575 = vmatprep.subr.mxu0 0.0
        %1576 = vmatpush1.msra.mxu0 0.0
        %1577 = vmatprep.subr.mxu0 0.0
        %1578 = vmatpush1.msra.mxu0 0.0
        %1579 = vmatprep.subr.mxu0 0.0
        %1580 = vmatpush1.msra.mxu0 0.0
        %1581 = vmatprep.subr.mxu0 0.0
        %1582 = vmatpush1.msra.mxu0 0.0
        %1583 = vmatprep.subr.mxu0 0.0
        %1584 = vmatpush1.msra.mxu0 0.0
        %1585 = vmatprep.subr.mxu0 0.0
        %1586 = vmatpush1.msra.mxu0 0.0
        %1587 = vmatprep.subr.mxu0 0.0
        %1588 = vmatpush1.msra.mxu0 0.0
        %1589 = vmatprep.subr.mxu0 0.0
        %1590 = vmatpush1.msra.mxu0 0.0
        %1591 = vmatprep.subr.mxu0 0.0
        %1592 = vmatpush1.msra.mxu0 0.0
        %1593 = vmatprep.subr.mxu0 0.0
        %1594 = vmatpush1.msra.mxu0 0.0
        %1595 = vmatprep.subr.mxu0 0.0
        %1596 = vmatpush1.msra.mxu0 0.0
        %1597 = vmatprep.mubr.f32.mxu0 0.0
        %1598 = vmatmul.mubr.f32.gmra.mrb[0].mxu0 %v1318
        %v1599 = vpop.f32.mrb[0].mxu0
        %v1600 = vadd.f32 0.0, %v1599
        %v1601 = vpop.f32.mrb[0].mxu0
        %v1602 = vadd.f32 0.0, %v1601
        %1603 = vdwg.mxu0
        %1604 = vmatprep.subr.mxu0 %v227
        %1605 = vmatpush1.msra.mxu0 %v226
        %1606 = vmatprep.subr.mxu0 0.0
        %1607 = vmatpush1.msra.mxu0 0.0
        %1608 = vmatprep.subr.mxu0 0.0
        %1609 = vmatpush1.msra.mxu0 0.0
        %1610 = vmatprep.subr.mxu0 0.0
        %1611 = vmatpush1.msra.mxu0 0.0
        %1612 = vmatprep.subr.mxu0 0.0
        %1613 = vmatpush1.msra.mxu0 0.0
        %1614 = vmatprep.subr.mxu0 0.0
        %1615 = vmatpush1.msra.mxu0 0.0
        %1616 = vmatprep.subr.mxu0 0.0
        %1617 = vmatpush1.msra.mxu0 0.0
        %1618 = vmatprep.subr.mxu0 0.0
        %1619 = vmatpush1.msra.mxu0 0.0
        %1620 = vmatprep.subr.mxu0 0.0
        %1621 = vmatpush1.msra.mxu0 0.0
        %1622 = vmatprep.subr.mxu0 0.0
        %1623 = vmatpush1.msra.mxu0 0.0
        %1624 = vmatprep.subr.mxu0 0.0
        %1625 = vmatpush1.msra.mxu0 0.0
        %1626 = vmatprep.subr.mxu0 0.0
        %1627 = vmatpush1.msra.mxu0 0.0
        %1628 = vmatprep.subr.mxu0 0.0
        %1629 = vmatpush1.msra.mxu0 0.0
        %1630 = vmatprep.subr.mxu0 0.0
        %1631 = vmatpush1.msra.mxu0 0.0
        %1632 = vmatprep.subr.mxu0 0.0
        %1633 = vmatpush1.msra.mxu0 0.0
        %1634 = vmatprep.subr.mxu0 0.0
        %1635 = vmatpush1.msra.mxu0 0.0
        %1636 = vmatprep.subr.mxu0 0.0
        %1637 = vmatpush1.msra.mxu0 0.0
        %1638 = vmatprep.subr.mxu0 0.0
        %1639 = vmatpush1.msra.mxu0 0.0
        %1640 = vmatprep.subr.mxu0 0.0
        %1641 = vmatpush1.msra.mxu0 0.0
        %1642 = vmatprep.subr.mxu0 0.0
        %1643 = vmatpush1.msra.mxu0 0.0
        %1644 = vmatprep.subr.mxu0 0.0
        %1645 = vmatpush1.msra.mxu0 0.0
        %1646 = vmatprep.subr.mxu0 0.0
        %1647 = vmatpush1.msra.mxu0 0.0
        %1648 = vmatprep.subr.mxu0 0.0
        %1649 = vmatpush1.msra.mxu0 0.0
        %1650 = vmatprep.subr.mxu0 0.0
        %1651 = vmatpush1.msra.mxu0 0.0
        %1652 = vmatprep.subr.mxu0 0.0
        %1653 = vmatpush1.msra.mxu0 0.0
        %1654 = vmatprep.subr.mxu0 0.0
        %1655 = vmatpush1.msra.mxu0 0.0
        %1656 = vmatprep.subr.mxu0 0.0
        %1657 = vmatpush1.msra.mxu0 0.0
        %1658 = vmatprep.subr.mxu0 0.0
        %1659 = vmatpush1.msra.mxu0 0.0
        %1660 = vmatprep.subr.mxu0 0.0
        %1661 = vmatpush1.msra.mxu0 0.0
        %1662 = vmatprep.subr.mxu0 0.0
        %1663 = vmatpush1.msra.mxu0 0.0
        %1664 = vmatprep.subr.mxu0 0.0
        %1665 = vmatpush1.msra.mxu0 0.0
        %1666 = vmatprep.subr.mxu0 0.0
        %1667 = vmatpush1.msra.mxu0 0.0
        %1668 = vmatprep.mubr.f32.mxu0 0.0
        %1669 = vmatmul.mubr.f32.gmra.mrb[0].mxu0 %v1318
        %v1670 = vpop.f32.mrb[0].mxu0
        %v1671 = vadd.f32 0.0, %v1670
        %v1672 = vpop.f32.mrb[0].mxu0
        %v1673 = vadd.f32 0.0, %v1672
        %1674 = vdwg.mxu0
        %1675 = vmatprep.subr.mxu0 %v229
        %1676 = vmatpush1.msra.mxu0 %v228
        %1677 = vmatprep.subr.mxu0 0.0
        %1678 = vmatpush1.msra.mxu0 0.0
        %1679 = vmatprep.subr.mxu0 0.0
        %1680 = vmatpush1.msra.mxu0 0.0
        %1681 = vmatprep.subr.mxu0 0.0
        %1682 = vmatpush1.msra.mxu0 0.0
        %1683 = vmatprep.subr.mxu0 0.0
        %1684 = vmatpush1.msra.mxu0 0.0
        %1685 = vmatprep.subr.mxu0 0.0
        %1686 = vmatpush1.msra.mxu0 0.0
        %1687 = vmatprep.subr.mxu0 0.0
        %1688 = vmatpush1.msra.mxu0 0.0
        %1689 = vmatprep.subr.mxu0 0.0
        %1690 = vmatpush1.msra.mxu0 0.0
        %1691 = vmatprep.subr.mxu0 0.0
        %1692 = vmatpush1.msra.mxu0 0.0
        %1693 = vmatprep.subr.mxu0 0.0
        %1694 = vmatpush1.msra.mxu0 0.0
        %1695 = vmatprep.subr.mxu0 0.0
        %1696 = vmatpush1.msra.mxu0 0.0
        %1697 = vmatprep.subr.mxu0 0.0
        %1698 = vmatpush1.msra.mxu0 0.0
        %1699 = vmatprep.subr.mxu0 0.0
        %1700 = vmatpush1.msra.mxu0 0.0
        %1701 = vmatprep.subr.mxu0 0.0
        %1702 = vmatpush1.msra.mxu0 0.0
        %1703 = vmatprep.subr.mxu0 0.0
        %1704 = vmatpush1.msra.mxu0 0.0
        %1705 = vmatprep.subr.mxu0 0.0
        %1706 = vmatpush1.msra.mxu0 0.0
        %1707 = vmatprep.subr.mxu0 0.0
        %1708 = vmatpush1.msra.mxu0 0.0
        %1709 = vmatprep.subr.mxu0 0.0
        %1710 = vmatpush1.msra.mxu0 0.0
        %1711 = vmatprep.subr.mxu0 0.0
        %1712 = vmatpush1.msra.mxu0 0.0
        %1713 = vmatprep.subr.mxu0 0.0
        %1714 = vmatpush1.msra.mxu0 0.0
        %1715 = vmatprep.subr.mxu0 0.0
        %1716 = vmatpush1.msra.mxu0 0.0
        %1717 = vmatprep.subr.mxu0 0.0
        %1718 = vmatpush1.msra.mxu0 0.0
        %1719 = vmatprep.subr.mxu0 0.0
        %1720 = vmatpush1.msra.mxu0 0.0
        %1721 = vmatprep.subr.mxu0 0.0
        %1722 = vmatpush1.msra.mxu0 0.0
        %1723 = vmatprep.subr.mxu0 0.0
        %1724 = vmatpush1.msra.mxu0 0.0
        %1725 = vmatprep.subr.mxu0 0.0
        %1726 = vmatpush1.msra.mxu0 0.0
        %1727 = vmatprep.subr.mxu0 0.0
        %1728 = vmatpush1.msra.mxu0 0.0
        %1729 = vmatprep.subr.mxu0 0.0
        %1730 = vmatpush1.msra.mxu0 0.0
        %1731 = vmatprep.subr.mxu0 0.0
        %1732 = vmatpush1.msra.mxu0 0.0
        %1733 = vmatprep.subr.mxu0 0.0
        %1734 = vmatpush1.msra.mxu0 0.0
        %1735 = vmatprep.subr.mxu0 0.0
        %1736 = vmatpush1.msra.mxu0 0.0
        %1737 = vmatprep.subr.mxu0 0.0
        %1738 = vmatpush1.msra.mxu0 0.0
        %1739 = vmatprep.mubr.f32.mxu0 0.0
        %1740 = vmatmul.mubr.f32.gmra.mrb[0].mxu0 %v1318
        %v1741 = vpop.f32.mrb[0].mxu0
        %v1742 = vadd.f32 0.0, %v1741
        %v1743 = vpop.f32.mrb[0].mxu0
        %v1744 = vadd.f32 0.0, %v1743
        %1745 = vdwg.mxu0
        %1746 = vmatprep.subr.mxu0 %v231
        %1747 = vmatpush1.msra.mxu0 %v230
        %1748 = vmatprep.subr.mxu0 0.0
        %1749 = vmatpush1.msra.mxu0 0.0
        %1750 = vmatprep.subr.mxu0 0.0
        %1751 = vmatpush1.msra.mxu0 0.0
        %1752 = vmatprep.subr.mxu0 0.0
        %1753 = vmatpush1.msra.mxu0 0.0
        %1754 = vmatprep.subr.mxu0 0.0
        %1755 = vmatpush1.msra.mxu0 0.0
        %1756 = vmatprep.subr.mxu0 0.0
        %1757 = vmatpush1.msra.mxu0 0.0
        %1758 = vmatprep.subr.mxu0 0.0
        %1759 = vmatpush1.msra.mxu0 0.0
        %1760 = vmatprep.subr.mxu0 0.0
        %1761 = vmatpush1.msra.mxu0 0.0
        %1762 = vmatprep.subr.mxu0 0.0
        %1763 = vmatpush1.msra.mxu0 0.0
        %1764 = vmatprep.subr.mxu0 0.0
        %1765 = vmatpush1.msra.mxu0 0.0
        %1766 = vmatprep.subr.mxu0 0.0
        %1767 = vmatpush1.msra.mxu0 0.0
        %1768 = vmatprep.subr.mxu0 0.0
        %1769 = vmatpush1.msra.mxu0 0.0
        %1770 = vmatprep.subr.mxu0 0.0
        %1771 = vmatpush1.msra.mxu0 0.0
        %1772 = vmatprep.subr.mxu0 0.0
        %1773 = vmatpush1.msra.mxu0 0.0
        %1774 = vmatprep.subr.mxu0 0.0
        %1775 = vmatpush1.msra.mxu0 0.0
        %1776 = vmatprep.subr.mxu0 0.0
        %1777 = vmatpush1.msra.mxu0 0.0
        %1778 = vmatprep.subr.mxu0 0.0
        %1779 = vmatpush1.msra.mxu0 0.0
        %1780 = vmatprep.subr.mxu0 0.0
        %1781 = vmatpush1.msra.mxu0 0.0
        %1782 = vmatprep.subr.mxu0 0.0
        %1783 = vmatpush1.msra.mxu0 0.0
        %1784 = vmatprep.subr.mxu0 0.0
        %1785 = vmatpush1.msra.mxu0 0.0
        %1786 = vmatprep.subr.mxu0 0.0
        %1787 = vmatpush1.msra.mxu0 0.0
        %1788 = vmatprep.subr.mxu0 0.0
        %1789 = vmatpush1.msra.mxu0 0.0
        %1790 = vmatprep.subr.mxu0 0.0
        %1791 = vmatpush1.msra.mxu0 0.0
        %1792 = vmatprep.subr.mxu0 0.0
        %1793 = vmatpush1.msra.mxu0 0.0
        %1794 = vmatprep.subr.mxu0 0.0
        %1795 = vmatpush1.msra.mxu0 0.0
        %1796 = vmatprep.subr.mxu0 0.0
        %1797 = vmatpush1.msra.mxu0 0.0
        %1798 = vmatprep.subr.mxu0 0.0
        %1799 = vmatpush1.msra.mxu0 0.0
        %1800 = vmatprep.subr.mxu0 0.0
        %1801 = vmatpush1.msra.mxu0 0.0
        %1802 = vmatprep.subr.mxu0 0.0
        %1803 = vmatpush1.msra.mxu0 0.0
        %1804 = vmatprep.subr.mxu0 0.0
        %1805 = vmatpush1.msra.mxu0 0.0
        %1806 = vmatprep.subr.mxu0 0.0
        %1807 = vmatpush1.msra.mxu0 0.0
        %1808 = vmatprep.subr.mxu0 0.0
        %1809 = vmatpush1.msra.mxu0 0.0
        %1810 = vmatprep.mubr.f32.mxu0 0.0
        %1811 = vmatmul.mubr.f32.gmra.mrb[0].mxu0 %v1318
        %v1812 = vpop.f32.mrb[0].mxu0
        %v1813 = vadd.f32 0.0, %v1812
        %v1814 = vpop.f32.mrb[0].mxu0
        %v1815 = vadd.f32 0.0, %v1814
        %1816 = vdwg.mxu0
        %1817 = vmatprep.subr.mxu0 %v233
        %1818 = vmatpush1.msra.mxu0 %v232
        %1819 = vmatprep.subr.mxu0 0.0
        %1820 = vmatpush1.msra.mxu0 0.0
        %1821 = vmatprep.subr.mxu0 0.0
        %1822 = vmatpush1.msra.mxu0 0.0
        %1823 = vmatprep.subr.mxu0 0.0
        %1824 = vmatpush1.msra.mxu0 0.0
        %1825 = vmatprep.subr.mxu0 0.0
        %1826 = vmatpush1.msra.mxu0 0.0
        %1827 = vmatprep.subr.mxu0 0.0
        %1828 = vmatpush1.msra.mxu0 0.0
        %1829 = vmatprep.subr.mxu0 0.0
        %1830 = vmatpush1.msra.mxu0 0.0
        %1831 = vmatprep.subr.mxu0 0.0
        %1832 = vmatpush1.msra.mxu0 0.0
        %1833 = vmatprep.subr.mxu0 0.0
        %1834 = vmatpush1.msra.mxu0 0.0
        %1835 = vmatprep.subr.mxu0 0.0
        %1836 = vmatpush1.msra.mxu0 0.0
        %1837 = vmatprep.subr.mxu0 0.0
        %1838 = vmatpush1.msra.mxu0 0.0
        %1839 = vmatprep.subr.mxu0 0.0
        %1840 = vmatpush1.msra.mxu0 0.0
        %1841 = vmatprep.subr.mxu0 0.0
        %1842 = vmatpush1.msra.mxu0 0.0
        %1843 = vmatprep.subr.mxu0 0.0
        %1844 = vmatpush1.msra.mxu0 0.0
        %1845 = vmatprep.subr.mxu0 0.0
        %1846 = vmatpush1.msra.mxu0 0.0
        %1847 = vmatprep.subr.mxu0 0.0
        %1848 = vmatpush1.msra.mxu0 0.0
        %1849 = vmatprep.subr.mxu0 0.0
        %1850 = vmatpush1.msra.mxu0 0.0
        %1851 = vmatprep.subr.mxu0 0.0
        %1852 = vmatpush1.msra.mxu0 0.0
        %1853 = vmatprep.subr.mxu0 0.0
        %1854 = vmatpush1.msra.mxu0 0.0
        %1855 = vmatprep.subr.mxu0 0.0
        %1856 = vmatpush1.msra.mxu0 0.0
        %1857 = vmatprep.subr.mxu0 0.0
        %1858 = vmatpush1.msra.mxu0 0.0
        %1859 = vmatprep.subr.mxu0 0.0
        %1860 = vmatpush1.msra.mxu0 0.0
        %1861 = vmatprep.subr.mxu0 0.0
        %1862 = vmatpush1.msra.mxu0 0.0
        %1863 = vmatprep.subr.mxu0 0.0
        %1864 = vmatpush1.msra.mxu0 0.0
        %1865 = vmatprep.subr.mxu0 0.0
        %1866 = vmatpush1.msra.mxu0 0.0
        %1867 = vmatprep.subr.mxu0 0.0
        %1868 = vmatpush1.msra.mxu0 0.0
        %1869 = vmatprep.subr.mxu0 0.0
        %1870 = vmatpush1.msra.mxu0 0.0
        %1871 = vmatprep.subr.mxu0 0.0
        %1872 = vmatpush1.msra.mxu0 0.0
        %1873 = vmatprep.subr.mxu0 0.0
        %1874 = vmatpush1.msra.mxu0 0.0
        %1875 = vmatprep.subr.mxu0 0.0
        %1876 = vmatpush1.msra.mxu0 0.0
        %1877 = vmatprep.subr.mxu0 0.0
        %1878 = vmatpush1.msra.mxu0 0.0
        %1879 = vmatprep.subr.mxu0 0.0
        %1880 = vmatpush1.msra.mxu0 0.0
        %1881 = vmatprep.mubr.f32.mxu0 0.0
        %1882 = vmatmul.mubr.f32.gmra.mrb[0].mxu0 %v1318
        %v1883 = vpop.f32.mrb[0].mxu0
        %v1884 = vadd.f32 0.0, %v1883
        %v1885 = vpop.f32.mrb[0].mxu0
        %v1886 = vadd.f32 0.0, %v1885
        %1887 = vdwg.mxu0
        %vm1888 = vcmask 261120
        %v1890 = vsel %vm1888, %v1314, 0
        %1892 = vmatprep.subr.mxu0 %v1251
        %1893 = vmatpush1.msra.mxu0 %v1250
        %1894 = vmatprep.subr.mxu0 %v1267
        %1895 = vmatpush1.msra.mxu0 %v1266
        %1896 = vmatprep.subr.mxu0 %v1283
        %1897 = vmatpush1.msra.mxu0 %v1282
        %1898 = vmatprep.subr.mxu0 %v1299
        %1899 = vmatpush1.msra.mxu0 %v1298
        %1900 = vmatprep.subr.mxu0 0.0
        %1901 = vmatpush1.msra.mxu0 0.0
        %1902 = vmatprep.subr.mxu0 0.0
        %1903 = vmatpush1.msra.mxu0 0.0
        %1904 = vmatprep.subr.mxu0 0.0
        %1905 = vmatpush1.msra.mxu0 0.0
        %1906 = vmatprep.subr.mxu0 0.0
        %1907 = vmatpush1.msra.mxu0 0.0
        %1908 = vmatprep.subr.mxu0 0.0
        %1909 = vmatpush1.msra.mxu0 0.0
        %1910 = vmatprep.subr.mxu0 0.0
        %1911 = vmatpush1.msra.mxu0 0.0
        %1912 = vmatprep.subr.mxu0 0.0
        %1913 = vmatpush1.msra.mxu0 0.0
        %1914 = vmatprep.subr.mxu0 0.0
        %1915 = vmatpush1.msra.mxu0 0.0
        %1916 = vmatprep.subr.mxu0 0.0
        %1917 = vmatpush1.msra.mxu0 0.0
        %1918 = vmatprep.subr.mxu0 0.0
        %1919 = vmatpush1.msra.mxu0 0.0
        %1920 = vmatprep.subr.mxu0 0.0
        %1921 = vmatpush1.msra.mxu0 0.0
        %1922 = vmatprep.subr.mxu0 0.0
        %1923 = vmatpush1.msra.mxu0 0.0
        %1924 = vmatprep.subr.mxu0 0.0
        %1925 = vmatpush1.msra.mxu0 0.0
        %1926 = vmatprep.subr.mxu0 0.0
        %1927 = vmatpush1.msra.mxu0 0.0
        %1928 = vmatprep.subr.mxu0 0.0
        %1929 = vmatpush1.msra.mxu0 0.0
        %1930 = vmatprep.subr.mxu0 0.0
        %1931 = vmatpush1.msra.mxu0 0.0
        %1932 = vmatprep.subr.mxu0 0.0
        %1933 = vmatpush1.msra.mxu0 0.0
        %1934 = vmatprep.subr.mxu0 0.0
        %1935 = vmatpush1.msra.mxu0 0.0
        %1936 = vmatprep.subr.mxu0 0.0
        %1937 = vmatpush1.msra.mxu0 0.0
        %1938 = vmatprep.subr.mxu0 0.0
        %1939 = vmatpush1.msra.mxu0 0.0
        %1940 = vmatprep.subr.mxu0 0.0
        %1941 = vmatpush1.msra.mxu0 0.0
        %1942 = vmatprep.subr.mxu0 0.0
        %1943 = vmatpush1.msra.mxu0 0.0
        %1944 = vmatprep.subr.mxu0 0.0
        %1945 = vmatpush1.msra.mxu0 0.0
        %1946 = vmatprep.subr.mxu0 0.0
        %1947 = vmatpush1.msra.mxu0 0.0
        %1948 = vmatprep.subr.mxu0 0.0
        %1949 = vmatpush1.msra.mxu0 0.0
        %1950 = vmatprep.subr.mxu0 0.0
        %1951 = vmatpush1.msra.mxu0 0.0
        %1952 = vmatprep.subr.mxu0 0.0
        %1953 = vmatpush1.msra.mxu0 0.0
        %1954 = vmatprep.subr.mxu0 0.0
        %1955 = vmatpush1.msra.mxu0 0.0
        %1956 = vmatprep.mubr.f32.mxu0 0.0
        %1957 = vmatmul.mubr.f32.gmra.mrb[0].mxu0 %v1890
        %v1958 = vpop.f32.mrb[0].mxu0
        %v1959 = vadd.f32 %v1387, %v1958
        %v1960 = vpop.f32.mrb[0].mxu0
        %v1961 = vadd.f32 %v1389, %v1960
        %1962 = vdwg.mxu0
        %1963 = vmatprep.subr.mxu0 %v1253
        %1964 = vmatpush1.msra.mxu0 %v1252
        %1965 = vmatprep.subr.mxu0 %v1269
        %1966 = vmatpush1.msra.mxu0 %v1268
        %1967 = vmatprep.subr.mxu0 %v1285
        %1968 = vmatpush1.msra.mxu0 %v1284
        %1969 = vmatprep.subr.mxu0 %v1301
        %1970 = vmatpush1.msra.mxu0 %v1300
        %1971 = vmatprep.subr.mxu0 0.0
        %1972 = vmatpush1.msra.mxu0 0.0
        %1973 = vmatprep.subr.mxu0 0.0
        %1974 = vmatpush1.msra.mxu0 0.0
        %1975 = vmatprep.subr.mxu0 0.0
        %1976 = vmatpush1.msra.mxu0 0.0
        %1977 = vmatprep.subr.mxu0 0.0
        %1978 = vmatpush1.msra.mxu0 0.0
        %1979 = vmatprep.subr.mxu0 0.0
        %1980 = vmatpush1.msra.mxu0 0.0
        %1981 = vmatprep.subr.mxu0 0.0
        %1982 = vmatpush1.msra.mxu0 0.0
        %1983 = vmatprep.subr.mxu0 0.0
        %1984 = vmatpush1.msra.mxu0 0.0
        %1985 = vmatprep.subr.mxu0 0.0
        %1986 = vmatpush1.msra.mxu0 0.0
        %1987 = vmatprep.subr.mxu0 0.0
        %1988 = vmatpush1.msra.mxu0 0.0
        %1989 = vmatprep.subr.mxu0 0.0
        %1990 = vmatpush1.msra.mxu0 0.0
        %1991 = vmatprep.subr.mxu0 0.0
        %1992 = vmatpush1.msra.mxu0 0.0
        %1993 = vmatprep.subr.mxu0 0.0
        %1994 = vmatpush1.msra.mxu0 0.0
        %1995 = vmatprep.subr.mxu0 0.0
        %1996 = vmatpush1.msra.mxu0 0.0
        %1997 = vmatprep.subr.mxu0 0.0
        %1998 = vmatpush1.msra.mxu0 0.0
        %1999 = vmatprep.subr.mxu0 0.0
        %2000 = vmatpush1.msra.mxu0 0.0
        %2001 = vmatprep.subr.mxu0 0.0
        %2002 = vmatpush1.msra.mxu0 0.0
        %2003 = vmatprep.subr.mxu0 0.0
        %2004 = vmatpush1.msra.mxu0 0.0
        %2005 = vmatprep.subr.mxu0 0.0
        %2006 = vmatpush1.msra.mxu0 0.0
        %2007 = vmatprep.subr.mxu0 0.0
        %2008 = vmatpush1.msra.mxu0 0.0
        %2009 = vmatprep.subr.mxu0 0.0
        %2010 = vmatpush1.msra.mxu0 0.0
        %2011 = vmatprep.subr.mxu0 0.0
        %2012 = vmatpush1.msra.mxu0 0.0
        %2013 = vmatprep.subr.mxu0 0.0
        %2014 = vmatpush1.msra.mxu0 0.0
        %2015 = vmatprep.subr.mxu0 0.0
        %2016 = vmatpush1.msra.mxu0 0.0
        %2017 = vmatprep.subr.mxu0 0.0
        %2018 = vmatpush1.msra.mxu0 0.0
        %2019 = vmatprep.subr.mxu0 0.0
        %2020 = vmatpush1.msra.mxu0 0.0
        %2021 = vmatprep.subr.mxu0 0.0
        %2022 = vmatpush1.msra.mxu0 0.0
        %2023 = vmatprep.subr.mxu0 0.0
        %2024 = vmatpush1.msra.mxu0 0.0
        %2025 = vmatprep.subr.mxu0 0.0
        %2026 = vmatpush1.msra.mxu0 0.0
        %2027 = vmatprep.mubr.f32.mxu0 0.0
        %2028 = vmatmul.mubr.f32.gmra.mrb[0].mxu0 %v1890
        %v2029 = vpop.f32.mrb[0].mxu0
        %v2030 = vadd.f32 %v1458, %v2029
        %v2031 = vpop.f32.mrb[0].mxu0
        %v2032 = vadd.f32 %v1460, %v2031
        %2033 = vdwg.mxu0
        %2034 = vmatprep.subr.mxu0 %v1255
        %2035 = vmatpush1.msra.mxu0 %v1254
        %2036 = vmatprep.subr.mxu0 %v1271
        %2037 = vmatpush1.msra.mxu0 %v1270
        %2038 = vmatprep.subr.mxu0 %v1287
        %2039 = vmatpush1.msra.mxu0 %v1286
        %2040 = vmatprep.subr.mxu0 %v1303
        %2041 = vmatpush1.msra.mxu0 %v1302
        %2042 = vmatprep.subr.mxu0 0.0
        %2043 = vmatpush1.msra.mxu0 0.0
        %2044 = vmatprep.subr.mxu0 0.0
        %2045 = vmatpush1.msra.mxu0 0.0
        %2046 = vmatprep.subr.mxu0 0.0
        %2047 = vmatpush1.msra.mxu0 0.0
        %2048 = vmatprep.subr.mxu0 0.0
        %2049 = vmatpush1.msra.mxu0 0.0
        %2050 = vmatprep.subr.mxu0 0.0
        %2051 = vmatpush1.msra.mxu0 0.0
        %2052 = vmatprep.subr.mxu0 0.0
        %2053 = vmatpush1.msra.mxu0 0.0
        %2054 = vmatprep.subr.mxu0 0.0
        %2055 = vmatpush1.msra.mxu0 0.0
        %2056 = vmatprep.subr.mxu0 0.0
        %2057 = vmatpush1.msra.mxu0 0.0
        %2058 = vmatprep.subr.mxu0 0.0
        %2059 = vmatpush1.msra.mxu0 0.0
        %2060 = vmatprep.subr.mxu0 0.0
        %2061 = vmatpush1.msra.mxu0 0.0
        %2062 = vmatprep.subr.mxu0 0.0
        %2063 = vmatpush1.msra.mxu0 0.0
        %2064 = vmatprep.subr.mxu0 0.0
        %2065 = vmatpush1.msra.mxu0 0.0
        %2066 = vmatprep.subr.mxu0 0.0
        %2067 = vmatpush1.msra.mxu0 0.0
        %2068 = vmatprep.subr.mxu0 0.0
        %2069 = vmatpush1.msra.mxu0 0.0
        %2070 = vmatprep.subr.mxu0 0.0
        %2071 = vmatpush1.msra.mxu0 0.0
        %2072 = vmatprep.subr.mxu0 0.0
        %2073 = vmatpush1.msra.mxu0 0.0
        %2074 = vmatprep.subr.mxu0 0.0
        %2075 = vmatpush1.msra.mxu0 0.0
        %2076 = vmatprep.subr.mxu0 0.0
        %2077 = vmatpush1.msra.mxu0 0.0
        %2078 = vmatprep.subr.mxu0 0.0
        %2079 = vmatpush1.msra.mxu0 0.0
        %2080 = vmatprep.subr.mxu0 0.0
        %2081 = vmatpush1.msra.mxu0 0.0
        %2082 = vmatprep.subr.mxu0 0.0
        %2083 = vmatpush1.msra.mxu0 0.0
        %2084 = vmatprep.subr.mxu0 0.0
        %2085 = vmatpush1.msra.mxu0 0.0
        %2086 = vmatprep.subr.mxu0 0.0
        %2087 = vmatpush1.msra.mxu0 0.0
        %2088 = vmatprep.subr.mxu0 0.0
        %2089 = vmatpush1.msra.mxu0 0.0
        %2090 = vmatprep.subr.mxu0 0.0
        %2091 = vmatpush1.msra.mxu0 0.0
        %2092 = vmatprep.subr.mxu0 0.0
        %2093 = vmatpush1.msra.mxu0 0.0
        %2094 = vmatprep.subr.mxu0 0.0
        %2095 = vmatpush1.msra.mxu0 0.0
        %2096 = vmatprep.subr.mxu0 0.0
        %2097 = vmatpush1.msra.mxu0 0.0
        %2098 = vmatprep.mubr.f32.mxu0 0.0
        %2099 = vmatmul.mubr.f32.gmra.mrb[0].mxu0 %v1890
        %v2100 = vpop.f32.mrb[0].mxu0
        %v2101 = vadd.f32 %v1529, %v2100
        %v2102 = vpop.f32.mrb[0].mxu0
        %v2103 = vadd.f32 %v1531, %v2102
        %2104 = vdwg.mxu0
        %2105 = vmatprep.subr.mxu0 %v1257
        %2106 = vmatpush1.msra.mxu0 %v1256
        %2107 = vmatprep.subr.mxu0 %v1273
        %2108 = vmatpush1.msra.mxu0 %v1272
        %2109 = vmatprep.subr.mxu0 %v1289
        %2110 = vmatpush1.msra.mxu0 %v1288
        %2111 = vmatprep.subr.mxu0 %v1305
        %2112 = vmatpush1.msra.mxu0 %v1304
        %2113 = vmatprep.subr.mxu0 0.0
        %2114 = vmatpush1.msra.mxu0 0.0
        %2115 = vmatprep.subr.mxu0 0.0
        %2116 = vmatpush1.msra.mxu0 0.0
        %2117 = vmatprep.subr.mxu0 0.0
        %2118 = vmatpush1.msra.mxu0 0.0
        %2119 = vmatprep.subr.mxu0 0.0
        %2120 = vmatpush1.msra.mxu0 0.0
        %2121 = vmatprep.subr.mxu0 0.0
        %2122 = vmatpush1.msra.mxu0 0.0
        %2123 = vmatprep.subr.mxu0 0.0
        %2124 = vmatpush1.msra.mxu0 0.0
        %2125 = vmatprep.subr.mxu0 0.0
        %2126 = vmatpush1.msra.mxu0 0.0
        %2127 = vmatprep.subr.mxu0 0.0
        %2128 = vmatpush1.msra.mxu0 0.0
        %2129 = vmatprep.subr.mxu0 0.0
        %2130 = vmatpush1.msra.mxu0 0.0
        %2131 = vmatprep.subr.mxu0 0.0
        %2132 = vmatpush1.msra.mxu0 0.0
        %2133 = vmatprep.subr.mxu0 0.0
        %2134 = vmatpush1.msra.mxu0 0.0
        %2135 = vmatprep.subr.mxu0 0.0
        %2136 = vmatpush1.msra.mxu0 0.0
        %2137 = vmatprep.subr.mxu0 0.0
        %2138 = vmatpush1.msra.mxu0 0.0
        %2139 = vmatprep.subr.mxu0 0.0
        %2140 = vmatpush1.msra.mxu0 0.0
        %2141 = vmatprep.subr.mxu0 0.0
        %2142 = vmatpush1.msra.mxu0 0.0
        %2143 = vmatprep.subr.mxu0 0.0
        %2144 = vmatpush1.msra.mxu0 0.0
        %2145 = vmatprep.subr.mxu0 0.0
        %2146 = vmatpush1.msra.mxu0 0.0
        %2147 = vmatprep.subr.mxu0 0.0
        %2148 = vmatpush1.msra.mxu0 0.0
        %2149 = vmatprep.subr.mxu0 0.0
        %2150 = vmatpush1.msra.mxu0 0.0
        %2151 = vmatprep.subr.mxu0 0.0
        %2152 = vmatpush1.msra.mxu0 0.0
        %2153 = vmatprep.subr.mxu0 0.0
        %2154 = vmatpush1.msra.mxu0 0.0
        %2155 = vmatprep.subr.mxu0 0.0
        %2156 = vmatpush1.msra.mxu0 0.0
        %2157 = vmatprep.subr.mxu0 0.0
        %2158 = vmatpush1.msra.mxu0 0.0
        %2159 = vmatprep.subr.mxu0 0.0
        %2160 = vmatpush1.msra.mxu0 0.0
        %2161 = vmatprep.subr.mxu0 0.0
        %2162 = vmatpush1.msra.mxu0 0.0
        %2163 = vmatprep.subr.mxu0 0.0
        %2164 = vmatpush1.msra.mxu0 0.0
        %2165 = vmatprep.subr.mxu0 0.0
        %2166 = vmatpush1.msra.mxu0 0.0
        %2167 = vmatprep.subr.mxu0 0.0
        %2168 = vmatpush1.msra.mxu0 0.0
        %2169 = vmatprep.mubr.f32.mxu0 0.0
        %2170 = vmatmul.mubr.f32.gmra.mrb[0].mxu0 %v1890
        %v2171 = vpop.f32.mrb[0].mxu0
        %v2172 = vadd.f32 %v1600, %v2171
        %v2173 = vpop.f32.mrb[0].mxu0
        %v2174 = vadd.f32 %v1602, %v2173
        %2175 = vdwg.mxu0
        %2176 = vmatprep.subr.mxu0 %v1259
        %2177 = vmatpush1.msra.mxu0 %v1258
        %2178 = vmatprep.subr.mxu0 %v1275
        %2179 = vmatpush1.msra.mxu0 %v1274
        %2180 = vmatprep.subr.mxu0 %v1291
        %2181 = vmatpush1.msra.mxu0 %v1290
        %2182 = vmatprep.subr.mxu0 %v1307
        %2183 = vmatpush1.msra.mxu0 %v1306
        %2184 = vmatprep.subr.mxu0 0.0
        %2185 = vmatpush1.msra.mxu0 0.0
        %2186 = vmatprep.subr.mxu0 0.0
        %2187 = vmatpush1.msra.mxu0 0.0
        %2188 = vmatprep.subr.mxu0 0.0
        %2189 = vmatpush1.msra.mxu0 0.0
        %2190 = vmatprep.subr.mxu0 0.0
        %2191 = vmatpush1.msra.mxu0 0.0
        %2192 = vmatprep.subr.mxu0 0.0
        %2193 = vmatpush1.msra.mxu0 0.0
        %2194 = vmatprep.subr.mxu0 0.0
        %2195 = vmatpush1.msra.mxu0 0.0
        %2196 = vmatprep.subr.mxu0 0.0
        %2197 = vmatpush1.msra.mxu0 0.0
        %2198 = vmatprep.subr.mxu0 0.0
        %2199 = vmatpush1.msra.mxu0 0.0
        %2200 = vmatprep.subr.mxu0 0.0
        %2201 = vmatpush1.msra.mxu0 0.0
        %2202 = vmatprep.subr.mxu0 0.0
        %2203 = vmatpush1.msra.mxu0 0.0
        %2204 = vmatprep.subr.mxu0 0.0
        %2205 = vmatpush1.msra.mxu0 0.0
        %2206 = vmatprep.subr.mxu0 0.0
        %2207 = vmatpush1.msra.mxu0 0.0
        %2208 = vmatprep.subr.mxu0 0.0
        %2209 = vmatpush1.msra.mxu0 0.0
        %2210 = vmatprep.subr.mxu0 0.0
        %2211 = vmatpush1.msra.mxu0 0.0
        %2212 = vmatprep.subr.mxu0 0.0
        %2213 = vmatpush1.msra.mxu0 0.0
        %2214 = vmatprep.subr.mxu0 0.0
        %2215 = vmatpush1.msra.mxu0 0.0
        %2216 = vmatprep.subr.mxu0 0.0
        %2217 = vmatpush1.msra.mxu0 0.0
        %2218 = vmatprep.subr.mxu0 0.0
        %2219 = vmatpush1.msra.mxu0 0.0
        %2220 = vmatprep.subr.mxu0 0.0
        %2221 = vmatpush1.msra.mxu0 0.0
        %2222 = vmatprep.subr.mxu0 0.0
        %2223 = vmatpush1.msra.mxu0 0.0
        %2224 = vmatprep.subr.mxu0 0.0
        %2225 = vmatpush1.msra.mxu0 0.0
        %2226 = vmatprep.subr.mxu0 0.0
        %2227 = vmatpush1.msra.mxu0 0.0
        %2228 = vmatprep.subr.mxu0 0.0
        %2229 = vmatpush1.msra.mxu0 0.0
        %2230 = vmatprep.subr.mxu0 0.0
        %2231 = vmatpush1.msra.mxu0 0.0
        %2232 = vmatprep.subr.mxu0 0.0
        %2233 = vmatpush1.msra.mxu0 0.0
        %2234 = vmatprep.subr.mxu0 0.0
        %2235 = vmatpush1.msra.mxu0 0.0
        %2236 = vmatprep.subr.mxu0 0.0
        %2237 = vmatpush1.msra.mxu0 0.0
        %2238 = vmatprep.subr.mxu0 0.0
        %2239 = vmatpush1.msra.mxu0 0.0
        %2240 = vmatprep.mubr.f32.mxu0 0.0
        %2241 = vmatmul.mubr.f32.gmra.mrb[0].mxu0 %v1890
        %v2242 = vpop.f32.mrb[0].mxu0
        %v2243 = vadd.f32 %v1671, %v2242
        %v2244 = vpop.f32.mrb[0].mxu0
        %v2245 = vadd.f32 %v1673, %v2244
        %2246 = vdwg.mxu0
        %2247 = vmatprep.subr.mxu0 %v1261
        %2248 = vmatpush1.msra.mxu0 %v1260
        %2249 = vmatprep.subr.mxu0 %v1277
        %2250 = vmatpush1.msra.mxu0 %v1276
        %2251 = vmatprep.subr.mxu0 %v1293
        %2252 = vmatpush1.msra.mxu0 %v1292
        %2253 = vmatprep.subr.mxu0 %v1309
        %2254 = vmatpush1.msra.mxu0 %v1308
        %2255 = vmatprep.subr.mxu0 0.0
        %2256 = vmatpush1.msra.mxu0 0.0
        %2257 = vmatprep.subr.mxu0 0.0
        %2258 = vmatpush1.msra.mxu0 0.0
        %2259 = vmatprep.subr.mxu0 0.0
        %2260 = vmatpush1.msra.mxu0 0.0
        %2261 = vmatprep.subr.mxu0 0.0
        %2262 = vmatpush1.msra.mxu0 0.0
        %2263 = vmatprep.subr.mxu0 0.0
        %2264 = vmatpush1.msra.mxu0 0.0
        %2265 = vmatprep.subr.mxu0 0.0
        %2266 = vmatpush1.msra.mxu0 0.0
        %2267 = vmatprep.subr.mxu0 0.0
        %2268 = vmatpush1.msra.mxu0 0.0
        %2269 = vmatprep.subr.mxu0 0.0
        %2270 = vmatpush1.msra.mxu0 0.0
        %2271 = vmatprep.subr.mxu0 0.0
        %2272 = vmatpush1.msra.mxu0 0.0
        %2273 = vmatprep.subr.mxu0 0.0
        %2274 = vmatpush1.msra.mxu0 0.0
        %2275 = vmatprep.subr.mxu0 0.0
        %2276 = vmatpush1.msra.mxu0 0.0
        %2277 = vmatprep.subr.mxu0 0.0
        %2278 = vmatpush1.msra.mxu0 0.0
        %2279 = vmatprep.subr.mxu0 0.0
        %2280 = vmatpush1.msra.mxu0 0.0
        %2281 = vmatprep.subr.mxu0 0.0
        %2282 = vmatpush1.msra.mxu0 0.0
        %2283 = vmatprep.subr.mxu0 0.0
        %2284 = vmatpush1.msra.mxu0 0.0
        %2285 = vmatprep.subr.mxu0 0.0
        %2286 = vmatpush1.msra.mxu0 0.0
        %2287 = vmatprep.subr.mxu0 0.0
        %2288 = vmatpush1.msra.mxu0 0.0
        %2289 = vmatprep.subr.mxu0 0.0
        %2290 = vmatpush1.msra.mxu0 0.0
        %2291 = vmatprep.subr.mxu0 0.0
        %2292 = vmatpush1.msra.mxu0 0.0
        %2293 = vmatprep.subr.mxu0 0.0
        %2294 = vmatpush1.msra.mxu0 0.0
        %2295 = vmatprep.subr.mxu0 0.0
        %2296 = vmatpush1.msra.mxu0 0.0
        %2297 = vmatprep.subr.mxu0 0.0
        %2298 = vmatpush1.msra.mxu0 0.0
        %2299 = vmatprep.subr.mxu0 0.0
        %2300 = vmatpush1.msra.mxu0 0.0
        %2301 = vmatprep.subr.mxu0 0.0
        %2302 = vmatpush1.msra.mxu0 0.0
        %2303 = vmatprep.subr.mxu0 0.0
        %2304 = vmatpush1.msra.mxu0 0.0
        %2305 = vmatprep.subr.mxu0 0.0
        %2306 = vmatpush1.msra.mxu0 0.0
        %2307 = vmatprep.subr.mxu0 0.0
        %2308 = vmatpush1.msra.mxu0 0.0
        %2309 = vmatprep.subr.mxu0 0.0
        %2310 = vmatpush1.msra.mxu0 0.0
        %2311 = vmatprep.mubr.f32.mxu0 0.0
        %2312 = vmatmul.mubr.f32.gmra.mrb[0].mxu0 %v1890
        %v2313 = vpop.f32.mrb[0].mxu0
        %v2314 = vadd.f32 %v1742, %v2313
        %v2315 = vpop.f32.mrb[0].mxu0
        %v2316 = vadd.f32 %v1744, %v2315
        %2317 = vdwg.mxu0
        %2318 = vmatprep.subr.mxu0 %v1263
        %2319 = vmatpush1.msra.mxu0 %v1262
        %2320 = vmatprep.subr.mxu0 %v1279
        %2321 = vmatpush1.msra.mxu0 %v1278
        %2322 = vmatprep.subr.mxu0 %v1295
        %2323 = vmatpush1.msra.mxu0 %v1294
        %2324 = vmatprep.subr.mxu0 %v1311
        %2325 = vmatpush1.msra.mxu0 %v1310
        %2326 = vmatprep.subr.mxu0 0.0
        %2327 = vmatpush1.msra.mxu0 0.0
        %2328 = vmatprep.subr.mxu0 0.0
        %2329 = vmatpush1.msra.mxu0 0.0
        %2330 = vmatprep.subr.mxu0 0.0
        %2331 = vmatpush1.msra.mxu0 0.0
        %2332 = vmatprep.subr.mxu0 0.0
        %2333 = vmatpush1.msra.mxu0 0.0
        %2334 = vmatprep.subr.mxu0 0.0
        %2335 = vmatpush1.msra.mxu0 0.0
        %2336 = vmatprep.subr.mxu0 0.0
        %2337 = vmatpush1.msra.mxu0 0.0
        %2338 = vmatprep.subr.mxu0 0.0
        %2339 = vmatpush1.msra.mxu0 0.0
        %2340 = vmatprep.subr.mxu0 0.0
        %2341 = vmatpush1.msra.mxu0 0.0
        %2342 = vmatprep.subr.mxu0 0.0
        %2343 = vmatpush1.msra.mxu0 0.0
        %2344 = vmatprep.subr.mxu0 0.0
        %2345 = vmatpush1.msra.mxu0 0.0
        %2346 = vmatprep.subr.mxu0 0.0
        %2347 = vmatpush1.msra.mxu0 0.0
        %2348 = vmatprep.subr.mxu0 0.0
        %2349 = vmatpush1.msra.mxu0 0.0
        %2350 = vmatprep.subr.mxu0 0.0
        %2351 = vmatpush1.msra.mxu0 0.0
        %2352 = vmatprep.subr.mxu0 0.0
        %2353 = vmatpush1.msra.mxu0 0.0
        %2354 = vmatprep.subr.mxu0 0.0
        %2355 = vmatpush1.msra.mxu0 0.0
        %2356 = vmatprep.subr.mxu0 0.0
        %2357 = vmatpush1.msra.mxu0 0.0
        %2358 = vmatprep.subr.mxu0 0.0
        %2359 = vmatpush1.msra.mxu0 0.0
        %2360 = vmatprep.subr.mxu0 0.0
        %2361 = vmatpush1.msra.mxu0 0.0
        %2362 = vmatprep.subr.mxu0 0.0
        %2363 = vmatpush1.msra.mxu0 0.0
        %2364 = vmatprep.subr.mxu0 0.0
        %2365 = vmatpush1.msra.mxu0 0.0
        %2366 = vmatprep.subr.mxu0 0.0
        %2367 = vmatpush1.msra.mxu0 0.0
        %2368 = vmatprep.subr.mxu0 0.0
        %2369 = vmatpush1.msra.mxu0 0.0
        %2370 = vmatprep.subr.mxu0 0.0
        %2371 = vmatpush1.msra.mxu0 0.0
        %2372 = vmatprep.subr.mxu0 0.0
        %2373 = vmatpush1.msra.mxu0 0.0
        %2374 = vmatprep.subr.mxu0 0.0
        %2375 = vmatpush1.msra.mxu0 0.0
        %2376 = vmatprep.subr.mxu0 0.0
        %2377 = vmatpush1.msra.mxu0 0.0
        %2378 = vmatprep.subr.mxu0 0.0
        %2379 = vmatpush1.msra.mxu0 0.0
        %2380 = vmatprep.subr.mxu0 0.0
        %2381 = vmatpush1.msra.mxu0 0.0
        %2382 = vmatprep.mubr.f32.mxu0 0.0
        %2383 = vmatmul.mubr.f32.gmra.mrb[0].mxu0 %v1890
        %v2384 = vpop.f32.mrb[0].mxu0
        %v2385 = vadd.f32 %v1813, %v2384
        %v2386 = vpop.f32.mrb[0].mxu0
        %v2387 = vadd.f32 %v1815, %v2386
        %2388 = vdwg.mxu0
        %2389 = vmatprep.subr.mxu0 %v1265
        %2390 = vmatpush1.msra.mxu0 %v1264
        %2391 = vmatprep.subr.mxu0 %v1281
        %2392 = vmatpush1.msra.mxu0 %v1280
        %2393 = vmatprep.subr.mxu0 %v1297
        %2394 = vmatpush1.msra.mxu0 %v1296
        %2395 = vmatprep.subr.mxu0 %v1313
        %2396 = vmatpush1.msra.mxu0 %v1312
        %2397 = vmatprep.subr.mxu0 0.0
        %2398 = vmatpush1.msra.mxu0 0.0
        %2399 = vmatprep.subr.mxu0 0.0
        %2400 = vmatpush1.msra.mxu0 0.0
        %2401 = vmatprep.subr.mxu0 0.0
        %2402 = vmatpush1.msra.mxu0 0.0
        %2403 = vmatprep.subr.mxu0 0.0
        %2404 = vmatpush1.msra.mxu0 0.0
        %2405 = vmatprep.subr.mxu0 0.0
        %2406 = vmatpush1.msra.mxu0 0.0
        %2407 = vmatprep.subr.mxu0 0.0
        %2408 = vmatpush1.msra.mxu0 0.0
        %2409 = vmatprep.subr.mxu0 0.0
        %2410 = vmatpush1.msra.mxu0 0.0
        %2411 = vmatprep.subr.mxu0 0.0
        %2412 = vmatpush1.msra.mxu0 0.0
        %2413 = vmatprep.subr.mxu0 0.0
        %2414 = vmatpush1.msra.mxu0 0.0
        %2415 = vmatprep.subr.mxu0 0.0
        %2416 = vmatpush1.msra.mxu0 0.0
        %2417 = vmatprep.subr.mxu0 0.0
        %2418 = vmatpush1.msra.mxu0 0.0
        %2419 = vmatprep.subr.mxu0 0.0
        %2420 = vmatpush1.msra.mxu0 0.0
        %2421 = vmatprep.subr.mxu0 0.0
        %2422 = vmatpush1.msra.mxu0 0.0
        %2423 = vmatprep.subr.mxu0 0.0
        %2424 = vmatpush1.msra.mxu0 0.0
        %2425 = vmatprep.subr.mxu0 0.0
        %2426 = vmatpush1.msra.mxu0 0.0
        %2427 = vmatprep.subr.mxu0 0.0
        %2428 = vmatpush1.msra.mxu0 0.0
        %2429 = vmatprep.subr.mxu0 0.0
        %2430 = vmatpush1.msra.mxu0 0.0
        %2431 = vmatprep.subr.mxu0 0.0
        %2432 = vmatpush1.msra.mxu0 0.0
        %2433 = vmatprep.subr.mxu0 0.0
        %2434 = vmatpush1.msra.mxu0 0.0
        %2435 = vmatprep.subr.mxu0 0.0
        %2436 = vmatpush1.msra.mxu0 0.0
        %2437 = vmatprep.subr.mxu0 0.0
        %2438 = vmatpush1.msra.mxu0 0.0
        %2439 = vmatprep.subr.mxu0 0.0
        %2440 = vmatpush1.msra.mxu0 0.0
        %2441 = vmatprep.subr.mxu0 0.0
        %2442 = vmatpush1.msra.mxu0 0.0
        %2443 = vmatprep.subr.mxu0 0.0
        %2444 = vmatpush1.msra.mxu0 0.0
        %2445 = vmatprep.subr.mxu0 0.0
        %2446 = vmatpush1.msra.mxu0 0.0
        %2447 = vmatprep.subr.mxu0 0.0
        %2448 = vmatpush1.msra.mxu0 0.0
        %2449 = vmatprep.subr.mxu0 0.0
        %2450 = vmatpush1.msra.mxu0 0.0
        %2451 = vmatprep.subr.mxu0 0.0
        %2452 = vmatpush1.msra.mxu0 0.0
        %2453 = vmatprep.mubr.f32.mxu0 0.0
        %2454 = vmatmul.mubr.f32.gmra.mrb[0].mxu0 %v1890
        %v2455 = vpop.f32.mrb[0].mxu0
        %v2456 = vadd.f32 %v1884, %v2455
        %v2457 = vpop.f32.mrb[0].mxu0
        %v2458 = vadd.f32 %v1886, %v2457
        %2459 = vdwg.mxu0
        %2460 = vst [vmem:[%s216] sm:$0xff] %v1959
        %2461 = vst [vmem:[%s216 + $0x8] sm:$0xff] %v1961
        %2462 = vst [vmem:[%s216 + $0x10] sm:$0xff] %v2030
        %2463 = vst [vmem:[%s216 + $0x18] sm:$0xff] %v2032
        %2464 = vst [vmem:[%s216 + $0x20] sm:$0xff] %v2101
        %2465 = vst [vmem:[%s216 + $0x28] sm:$0xff] %v2103
        %2466 = vst [vmem:[%s216 + $0x30] sm:$0xff] %v2172
        %2467 = vst [vmem:[%s216 + $0x38] sm:$0xff] %v2174
        %2468 = vst [vmem:[%s216 + $0x40] sm:$0xff] %v2243
        %2469 = vst [vmem:[%s216 + $0x48] sm:$0xff] %v2245
        %2470 = vst [vmem:[%s216 + $0x50] sm:$0xff] %v2314
        %2471 = vst [vmem:[%s216 + $0x58] sm:$0xff] %v2316
        %2472 = vst [vmem:[%s216 + $0x60] sm:$0xff] %v2385
        %2473 = vst [vmem:[%s216 + $0x68] sm:$0xff] %v2387
        %2474 = vst [vmem:[%s216 + $0x70] sm:$0xff] %v2456
        %2475 = vst [vmem:[%s216 + $0x78] sm:$0xff] %v2458
        %s2476 = smul.u32 16, %s18
        %p2477 = scmp.lt.s32.totalorder %s2476, 31
        %s2478 = scalar_select %p2477, %s2476, 31
        %s2479 = smul.addr %s2478, 8
        %s2480 = scalar_lea.vmem %s4, %s2479
        // Predicated region
        $region41: #{_forward_impl.1} parent=35 // pred_check
          %p2481 = pneg %p125
        $region42: #{_forward_impl.1} parent=35 // pred_check_branch
          %2483 = sbr.rel (%p2481) target = $region44
        $region43: #{_forward_impl.1} parent=35 // pred_region
          %s2484 = smul.u32 16, %s18
        $region44: #{_forward_impl.1} parent=35 // pred_fallthru
          _
      $region36: #{_forward_impl.1} parent=5 // pred_fallthru
        _
      %p2485 = scmp.le.s32.totalorder 2, %s13
      // Predicated region
      $region45: #{_forward_impl.1} parent=5 // pred_check
        %p2486 = pneg %p2485
      $region46: #{_forward_impl.1} parent=5 // pred_check_branch
        %2488 = sbr.rel (%p2486) target = $region48
      $region47: #{_forward_impl.1} parent=5 // pred_region
        %s2489 = ssub.s32 %s13, 2
        // Predicated region
        $region49: #{_forward_impl.1} parent=47 // pred_check
          %p2490 = pneg %p131
        $region50: #{_forward_impl.1} parent=47 // pred_check_branch
          %2492 = sbr.rel (%p2490) target = $region52
        $region51: #{_forward_impl.1} parent=47 // pred_region
          %s2493 = smul.u32 16, %s19
          %p2494 = scmp.lt.s32.totalorder %s2493, 31
          %s2495 = scalar_select %p2494, %s2493, 31
          %s2496 = smul.addr %s2495, 8
          %s2497 = scalar_lea.vmem %s4, %s2496
        $region52: #{_forward_impl.1} parent=47 // pred_fallthru
          _
      $region48: #{_forward_impl.1} parent=5 // pred_fallthru
        _
    $region6: #{_forward_impl.1} parent=1 // loop_footer
      %s17 = sadd.s32 1, %s13
    $region7: #{_forward_impl.1} parent=1 // loop_footer_branch
      %12 = sbr.rel target = $region3
    $region8: #{_forward_impl.1} parent=1 // loop_exit
      _
    %2498 = vsyncpa [#allocation3], 1
    %s2499 = scalar_lea.sflag [#allocation3], 1
    %2500 = vsyncpa %s2499, 1

</llo_original>
